<compile_context>
chip_gen: v7x
topology: tpu7x:2x2x1
jax: 0.10.0
libtpu: 0.0.40
codegen_flags: <defaults>
</compile_context>

<pallas_src>
import functools

import jax
import jax.numpy as jnp
from jax.experimental import pallas as pl
from jax.experimental.pallas import tpu as pltpu

NUM_HEROES = 10
_LANES = 128


def _tree_sum(xs):
    """Balanced pairwise sum — shorter dependent add chain than serial acc."""
    xs = list(xs)
    while len(xs) > 1:
        nxt = [xs[i] + xs[i + 1] for i in range(0, len(xs) - 1, 2)]
        if len(xs) % 2:
            nxt.append(xs[-1])
        xs = nxt
    return xs[0]


def _ffnn_kernel(x_ref,        # (H*Bp, F)           f32, hero-major rows
                 w1_ref,       # (F,  S1)            bf16
                 w2_ref,       # (S1, S2)            bf16
                 w3_ref,       # (S2, S3)            bf16
                 head_ref,     # (H*S3 + 128, 128)   bf16  [w4_pad ; w5_pad]
                 bias_ref,     # (8, 128)            f32   rows 0..4 = b1..b5
                 out_ref,      # (Bp, 128)           f32
                 *, bp, s1, s2, s3):
    f32, bf16 = jnp.float32, jnp.bfloat16

    # One (8,128) = single-vreg load for all five biases; lane-truncate per use.
    b_all = bias_ref[...]
    b1 = b_all[0:1, :s1]
    b2 = b_all[1:2, :s2]
    b3 = b_all[2:3, :s3]
    b4 = b_all[3:4, :]
    b5 = b_all[4:5, :]

    # --- Shared trunk: all heroes folded into the matmul M dimension --------
    # bf16 MXU inputs, f32 accumulation; bias-add/ReLU stay in f32 (v5e-safe).
    t = x_ref[...].astype(bf16)
    t = jnp.maximum(
        jnp.dot(t, w1_ref[...], preferred_element_type=f32) + b1, 0.0)
    t = jnp.maximum(
        jnp.dot(t.astype(bf16), w2_ref[...], preferred_element_type=f32) + b2,
        0.0)
    t = jnp.maximum(
        jnp.dot(t.astype(bf16), w3_ref[...], preferred_element_type=f32) + b3,
        0.0)
    # t: (H*Bp, S3) f32; rows [h*Bp, (h+1)*Bp) belong to hero h (tile-aligned).

    # --- Head layer 1: concat-free — cat(vals, 1) @ W4 == sum_h vals_h @ W4_h
    partials = []
    for h in range(NUM_HEROES):                        # unrolled at trace time
        xh = t[h * bp:(h + 1) * bp, :].astype(bf16)    # (Bp, S3), aligned slice
        wh = head_ref[pl.ds(h * s3, s3), :]            # (S3, 128) bf16
        partials.append(jnp.dot(xh, wh, preferred_element_type=f32))
    y = jnp.maximum(_tree_sum(partials) + b4, 0.0)     # (Bp, 128) f32

    # --- Head layer 2: lane-dense padded labels ------------------------------
    w5 = head_ref[pl.ds(NUM_HEROES * s3, _LANES), :]   # (128, 128) bf16
    out_ref[...] = (
        jnp.dot(y.astype(bf16), w5, preferred_element_type=f32) + b5)


def prepare_params(params):
    """ONE-TIME parameter prep (not per forward call).

    - weights cast to bf16 (half the DMA bytes, bf16-native MXU path),
    - w4 and the lane-padded w5 stacked into one (H*S3 + 128, 128) operand,
    - all five biases packed into one (8, 128) f32 buffer (one per sublane row).
    """
    f32, bf16 = jnp.float32, jnp.bfloat16
    s1 = params["w1"].shape[1]
    s2 = params["w2"].shape[1]
    s3 = params["w3"].shape[1]
    fin = params["w4"].shape[1]
    num_labels = params["w5"].shape[1]
    assert max(s1, s2, s3, fin, num_labels) <= _LANES

    w4p = jnp.zeros((NUM_HEROES * s3, _LANES), f32).at[:, :fin].set(
        params["w4"])
    w5p = jnp.zeros((_LANES, _LANES), f32).at[:fin, :num_labels].set(
        params["w5"])
    head_w = jnp.concatenate([w4p, w5p], axis=0).astype(bf16)

    bias = jnp.zeros((8, _LANES), f32)
    bias = bias.at[0, :s1].set(params["b1"][0])
    bias = bias.at[1, :s2].set(params["b2"][0])
    bias = bias.at[2, :s3].set(params["b3"][0])
    bias = bias.at[3, :fin].set(params["b4"][0])
    bias = bias.at[4, :num_labels].set(params["b5"][0])

    return {
        "w1": params["w1"].astype(bf16),
        "w2": params["w2"].astype(bf16),
        "w3": params["w3"].astype(bf16),
        "head_w": head_w,
        "bias": bias,
    }


def shared_weights_ffnn(hero_features, prepared, num_labels):
    """hero_features: (H, B, F) float32 -> (B, num_labels) float32."""
    H, B, F = hero_features.shape
    assert H == NUM_HEROES
    s1 = prepared["w1"].shape[1]
    s2 = prepared["w2"].shape[1]
    s3 = prepared["w3"].shape[1]

    # Pad the batch so every per-hero row block starts on a sublane/packing
    # tile boundary (16 rows covers both f32 and bf16 packed layouts): the
    # per-hero head slices become free aligned reads, no cross-sublane relayout.
    bp = max(16, ((B + 15) // 16) * 16)
    if bp != B:
        hero_features = jnp.pad(hero_features,
                                ((0, 0), (0, bp - B), (0, 0)))
    x2d = hero_features.reshape(H * bp, F)     # hero-major row order

    vmem = pl.BlockSpec(memory_space=pltpu.MemorySpace.VMEM)
    kernel = functools.partial(_ffnn_kernel, bp=bp, s1=s1, s2=s2, s3=s3)

    # ~150 KiB of packed weights + a few KiB of activations: a single
    # grid-free, fully VMEM-resident invocation is the fastest structure at
    # small B.  (Large-B follow-up: 1-D batch grid, constant weight index_maps,
    # dimension_semantics=("parallel",), B_TILE sized for 64 MiB VMEM on v7x.)
    out_padded = pl.pallas_call(
        kernel,
        out_shape=jax.ShapeDtypeStruct((bp, _LANES), jnp.float32),
        in_specs=[vmem] * 6,
        out_specs=vmem,
    )(x2d, prepared["w1"], prepared["w2"], prepared["w3"],
      prepared["head_w"], prepared["bias"])
    return out_padded[:B, :num_labels]


def _reference(hero_features, params, matmul_dtype=jnp.float32):
    """Pure-JAX reference mirroring the PyTorch forward.

    matmul_dtype=bfloat16 reproduces the kernel's numerics (bf16 MXU inputs,
    f32 accumulation); float32 gives the exact module semantics.
    """
    def dot(a, b):
        return jnp.dot(a.astype(matmul_dtype), b.astype(matmul_dtype),
                       preferred_element_type=jnp.float32)

    vals = []
    for h in range(hero_features.shape[0]):
        x = hero_features[h]
        x = jnp.maximum(dot(x, params["w1"]) + params["b1"], 0.0)
        x = jnp.maximum(dot(x, params["w2"]) + params["b2"], 0.0)
        x = jnp.maximum(dot(x, params["w3"]) + params["b3"], 0.0)
        vals.append(x)
    x = jnp.concatenate(vals, axis=1)
    x = jnp.maximum(dot(x, params["w4"]) + params["b4"], 0.0)
    return dot(x, params["w5"]) + params["b5"]


def _init_params(key, num_features_per_hero, num_labels,
                 shared_layer_sizes=(128, 64, 32), final_layer_sizes=(128,)):
    """Deterministic synthetic parameters (shapes match the PyTorch module)."""
    ks = jax.random.split(key, 10)
    f = num_features_per_hero
    s1, s2, s3 = shared_layer_sizes
    fin = final_layer_sizes[0]
    cat = NUM_HEROES * s3
    scale = 0.1
    return {
        "w1": scale * jax.random.normal(ks[0], (f, s1), jnp.float32),
        "b1": scale * jax.random.normal(ks[1], (1, s1), jnp.float32),
        "w2": scale * jax.random.normal(ks[2], (s1, s2), jnp.float32),
        "b2": scale * jax.random.normal(ks[3], (1, s2), jnp.float32),
        "w3": scale * jax.random.normal(ks[4], (s2, s3), jnp.float32),
        "b3": scale * jax.random.normal(ks[5], (1, s3), jnp.float32),
        "w4": scale * jax.random.normal(ks[6], (cat, fin), jnp.float32),
        "b4": scale * jax.random.normal(ks[7], (1, fin), jnp.float32),
        "w5": scale * jax.random.normal(ks[8], (fin, num_labels), jnp.float32),
        "b5": scale * jax.random.normal(ks[9], (1, num_labels), jnp.float32),
    }


if __name__ == "__main__":
    key = jax.random.PRNGKey(0)
    k_params, k_x = jax.random.split(key)

    batch = 2
    num_features_per_hero = 16
    num_labels = 3

    params = _init_params(k_params, num_features_per_hero, num_labels)
    prepared = prepare_params(params)     # one-time packing, NOT per call

    hero_features = jax.random.normal(
        k_x, (NUM_HEROES, batch, num_features_per_hero), jnp.float32)

    out = shared_weights_ffnn(hero_features, prepared, num_labels)
    out = jax.block_until_ready(out)
    assert out.shape == (batch, num_labels)

    # Numerics-matched reference (bf16 matmul inputs, f32 accumulation).
    ref_bf16 = _reference(hero_features, params, matmul_dtype=jnp.bfloat16)
    assert jnp.allclose(out, ref_bf16, atol=2e-3, rtol=2e-3), \
        "mismatch vs bf16-matched reference"

    # Full-f32 reference (PyTorch semantics); tolerance sized for bf16 matmuls.
    ref_f32 = _reference(hero_features, params, matmul_dtype=jnp.float32)
    assert jnp.allclose(out, ref_f32, atol=5e-2, rtol=5e-2), \
        "mismatch vs f32 reference"

    print("KERNEL_OK")
</pallas_src>

<mosaic_0001>
module attributes {stable_mosaic.version = 11 : i64} {
  func.func @_ffnn_kernel(%arg0: memref<160x16xf32, #tpu.memory_space<vmem>>, %arg1: memref<16x128xbf16, #tpu.memory_space<vmem>>, %arg2: memref<128x64xbf16, #tpu.memory_space<vmem>>, %arg3: memref<64x32xbf16, #tpu.memory_space<vmem>>, %arg4: memref<448x128xbf16, #tpu.memory_space<vmem>>, %arg5: memref<8x128xf32, #tpu.memory_space<vmem>>, %arg6: memref<16x128xf32, #tpu.memory_space<vmem>>) attributes {dimension_semantics = [], scalar_prefetch = 0 : i64, scratch_operands = 0 : i64, tpu.core_type = #tpu.core_type<tc>} {
    %c0 = arith.constant 0 : index
    %c0_0 = arith.constant 0 : index
    %0 = vector.load %arg5[%c0, %c0_0] : memref<8x128xf32, #tpu.memory_space<vmem>>, vector<8x128xf32>
    %1 = vector.extract_strided_slice %0 {offsets = [0, 0], sizes = [1, 128], strides = [1, 1]} : vector<8x128xf32> to vector<1x128xf32>
    %2 = vector.extract_strided_slice %0 {offsets = [1, 0], sizes = [1, 64], strides = [1, 1]} : vector<8x128xf32> to vector<1x64xf32>
    %3 = vector.extract_strided_slice %0 {offsets = [2, 0], sizes = [1, 32], strides = [1, 1]} : vector<8x128xf32> to vector<1x32xf32>
    %4 = vector.extract_strided_slice %0 {offsets = [3, 0], sizes = [1, 128], strides = [1, 1]} : vector<8x128xf32> to vector<1x128xf32>
    %5 = vector.extract_strided_slice %0 {offsets = [4, 0], sizes = [1, 128], strides = [1, 1]} : vector<8x128xf32> to vector<1x128xf32>
    %c0_1 = arith.constant 0 : index
    %c0_2 = arith.constant 0 : index
    %6 = vector.load %arg0[%c0_1, %c0_2] : memref<160x16xf32, #tpu.memory_space<vmem>>, vector<160x16xf32>
    %7 = arith.truncf %6 : vector<160x16xf32> to vector<160x16xbf16>
    %c0_3 = arith.constant 0 : index
    %c0_4 = arith.constant 0 : index
    %8 = vector.load %arg1[%c0_3, %c0_4] : memref<16x128xbf16, #tpu.memory_space<vmem>>, vector<16x128xbf16>
    %cst = arith.constant dense<0.000000e+00> : vector<160x128xf32>
    %9 = tpu.matmul %7, %8, %cst {dimension_numbers = #tpu.dot_dimension_numbers<[1], [0], [0], [1], [0, 0, 1, 1], [], []>} : vector<160x16xbf16>, vector<16x128xbf16>, vector<160x128xf32> -> vector<160x128xf32>
    %10 = vector.broadcast %1 : vector<1x128xf32> to vector<160x128xf32>
    %11 = arith.addf %9, %10 : vector<160x128xf32>
    %cst_5 = arith.constant 0.000000e+00 : f32
    %12 = vector.broadcast %cst_5 : f32 to vector<160x128xf32>
    %13 = arith.maximumf %11, %12 : vector<160x128xf32>
    %14 = arith.truncf %13 : vector<160x128xf32> to vector<160x128xbf16>
    %c0_6 = arith.constant 0 : index
    %c0_7 = arith.constant 0 : index
    %15 = vector.load %arg2[%c0_6, %c0_7] : memref<128x64xbf16, #tpu.memory_space<vmem>>, vector<128x64xbf16>
    %cst_8 = arith.constant dense<0.000000e+00> : vector<160x64xf32>
    %16 = tpu.matmul %14, %15, %cst_8 {dimension_numbers = #tpu.dot_dimension_numbers<[1], [0], [0], [1], [0, 0, 1, 1], [], []>} : vector<160x128xbf16>, vector<128x64xbf16>, vector<160x64xf32> -> vector<160x64xf32>
    %17 = vector.broadcast %2 : vector<1x64xf32> to vector<160x64xf32>
    %18 = arith.addf %16, %17 : vector<160x64xf32>
    %cst_9 = arith.constant 0.000000e+00 : f32
    %19 = vector.broadcast %cst_9 : f32 to vector<160x64xf32>
    %20 = arith.maximumf %18, %19 : vector<160x64xf32>
    %21 = arith.truncf %20 : vector<160x64xf32> to vector<160x64xbf16>
    %c0_10 = arith.constant 0 : index
    %c0_11 = arith.constant 0 : index
    %22 = vector.load %arg3[%c0_10, %c0_11] : memref<64x32xbf16, #tpu.memory_space<vmem>>, vector<64x32xbf16>
    %cst_12 = arith.constant dense<0.000000e+00> : vector<160x32xf32>
    %23 = tpu.matmul %21, %22, %cst_12 {dimension_numbers = #tpu.dot_dimension_numbers<[1], [0], [0], [1], [0, 0, 1, 1], [], []>} : vector<160x64xbf16>, vector<64x32xbf16>, vector<160x32xf32> -> vector<160x32xf32>
    %24 = vector.broadcast %3 : vector<1x32xf32> to vector<160x32xf32>
    %25 = arith.addf %23, %24 : vector<160x32xf32>
    %cst_13 = arith.constant 0.000000e+00 : f32
    %26 = vector.broadcast %cst_13 : f32 to vector<160x32xf32>
    %27 = arith.maximumf %25, %26 : vector<160x32xf32>
    %28 = vector.extract_strided_slice %27 {offsets = [0, 0], sizes = [16, 32], strides = [1, 1]} : vector<160x32xf32> to vector<16x32xf32>
    %29 = arith.truncf %28 : vector<16x32xf32> to vector<16x32xbf16>
    %c0_14 = arith.constant 0 : index
    %c0_15 = arith.constant 0 : index
    %30 = vector.load %arg4[%c0_14, %c0_15] : memref<448x128xbf16, #tpu.memory_space<vmem>>, vector<32x128xbf16>
    %cst_16 = arith.constant dense<0.000000e+00> : vector<16x128xf32>
    %31 = tpu.matmul %29, %30, %cst_16 {dimension_numbers = #tpu.dot_dimension_numbers<[1], [0], [0], [1], [0, 0, 1, 1], [], []>} : vector<16x32xbf16>, vector<32x128xbf16>, vector<16x128xf32> -> vector<16x128xf32>
    %32 = vector.extract_strided_slice %27 {offsets = [16, 0], sizes = [16, 32], strides = [1, 1]} : vector<160x32xf32> to vector<16x32xf32>
    %33 = arith.truncf %32 : vector<16x32xf32> to vector<16x32xbf16>
    %c32 = arith.constant 32 : index
    %c0_17 = arith.constant 0 : index
    %34 = vector.load %arg4[%c32, %c0_17] : memref<448x128xbf16, #tpu.memory_space<vmem>>, vector<32x128xbf16>
    %cst_18 = arith.constant dense<0.000000e+00> : vector<16x128xf32>
    %35 = tpu.matmul %33, %34, %cst_18 {dimension_numbers = #tpu.dot_dimension_numbers<[1], [0], [0], [1], [0, 0, 1, 1], [], []>} : vector<16x32xbf16>, vector<32x128xbf16>, vector<16x128xf32> -> vector<16x128xf32>
    %36 = vector.extract_strided_slice %27 {offsets = [32, 0], sizes = [16, 32], strides = [1, 1]} : vector<160x32xf32> to vector<16x32xf32>
    %37 = arith.truncf %36 : vector<16x32xf32> to vector<16x32xbf16>
    %c64 = arith.constant 64 : index
    %c0_19 = arith.constant 0 : index
    %38 = vector.load %arg4[%c64, %c0_19] : memref<448x128xbf16, #tpu.memory_space<vmem>>, vector<32x128xbf16>
    %cst_20 = arith.constant dense<0.000000e+00> : vector<16x128xf32>
    %39 = tpu.matmul %37, %38, %cst_20 {dimension_numbers = #tpu.dot_dimension_numbers<[1], [0], [0], [1], [0, 0, 1, 1], [], []>} : vector<16x32xbf16>, vector<32x128xbf16>, vector<16x128xf32> -> vector<16x128xf32>
    %40 = vector.extract_strided_slice %27 {offsets = [48, 0], sizes = [16, 32], strides = [1, 1]} : vector<160x32xf32> to vector<16x32xf32>
    %41 = arith.truncf %40 : vector<16x32xf32> to vector<16x32xbf16>
    %c96 = arith.constant 96 : index
    %c0_21 = arith.constant 0 : index
    %42 = vector.load %arg4[%c96, %c0_21] : memref<448x128xbf16, #tpu.memory_space<vmem>>, vector<32x128xbf16>
    %cst_22 = arith.constant dense<0.000000e+00> : vector<16x128xf32>
    %43 = tpu.matmul %41, %42, %cst_22 {dimension_numbers = #tpu.dot_dimension_numbers<[1], [0], [0], [1], [0, 0, 1, 1], [], []>} : vector<16x32xbf16>, vector<32x128xbf16>, vector<16x128xf32> -> vector<16x128xf32>
    %44 = vector.extract_strided_slice %27 {offsets = [64, 0], sizes = [16, 32], strides = [1, 1]} : vector<160x32xf32> to vector<16x32xf32>
    %45 = arith.truncf %44 : vector<16x32xf32> to vector<16x32xbf16>
    %c128 = arith.constant 128 : index
    %c0_23 = arith.constant 0 : index
    %46 = vector.load %arg4[%c128, %c0_23] : memref<448x128xbf16, #tpu.memory_space<vmem>>, vector<32x128xbf16>
    %cst_24 = arith.constant dense<0.000000e+00> : vector<16x128xf32>
    %47 = tpu.matmul %45, %46, %cst_24 {dimension_numbers = #tpu.dot_dimension_numbers<[1], [0], [0], [1], [0, 0, 1, 1], [], []>} : vector<16x32xbf16>, vector<32x128xbf16>, vector<16x128xf32> -> vector<16x128xf32>
    %48 = vector.extract_strided_slice %27 {offsets = [80, 0], sizes = [16, 32], strides = [1, 1]} : vector<160x32xf32> to vector<16x32xf32>
    %49 = arith.truncf %48 : vector<16x32xf32> to vector<16x32xbf16>
    %c160 = arith.constant 160 : index
    %c0_25 = arith.constant 0 : index
    %50 = vector.load %arg4[%c160, %c0_25] : memref<448x128xbf16, #tpu.memory_space<vmem>>, vector<32x128xbf16>
    %cst_26 = arith.constant dense<0.000000e+00> : vector<16x128xf32>
    %51 = tpu.matmul %49, %50, %cst_26 {dimension_numbers = #tpu.dot_dimension_numbers<[1], [0], [0], [1], [0, 0, 1, 1], [], []>} : vector<16x32xbf16>, vector<32x128xbf16>, vector<16x128xf32> -> vector<16x128xf32>
    %52 = vector.extract_strided_slice %27 {offsets = [96, 0], sizes = [16, 32], strides = [1, 1]} : vector<160x32xf32> to vector<16x32xf32>
    %53 = arith.truncf %52 : vector<16x32xf32> to vector<16x32xbf16>
    %c192 = arith.constant 192 : index
    %c0_27 = arith.constant 0 : index
    %54 = vector.load %arg4[%c192, %c0_27] : memref<448x128xbf16, #tpu.memory_space<vmem>>, vector<32x128xbf16>
    %cst_28 = arith.constant dense<0.000000e+00> : vector<16x128xf32>
    %55 = tpu.matmul %53, %54, %cst_28 {dimension_numbers = #tpu.dot_dimension_numbers<[1], [0], [0], [1], [0, 0, 1, 1], [], []>} : vector<16x32xbf16>, vector<32x128xbf16>, vector<16x128xf32> -> vector<16x128xf32>
    %56 = vector.extract_strided_slice %27 {offsets = [112, 0], sizes = [16, 32], strides = [1, 1]} : vector<160x32xf32> to vector<16x32xf32>
    %57 = arith.truncf %56 : vector<16x32xf32> to vector<16x32xbf16>
    %c224 = arith.constant 224 : index
    %c0_29 = arith.constant 0 : index
    %58 = vector.load %arg4[%c224, %c0_29] : memref<448x128xbf16, #tpu.memory_space<vmem>>, vector<32x128xbf16>
    %cst_30 = arith.constant dense<0.000000e+00> : vector<16x128xf32>
    %59 = tpu.matmul %57, %58, %cst_30 {dimension_numbers = #tpu.dot_dimension_numbers<[1], [0], [0], [1], [0, 0, 1, 1], [], []>} : vector<16x32xbf16>, vector<32x128xbf16>, vector<16x128xf32> -> vector<16x128xf32>
    %60 = vector.extract_strided_slice %27 {offsets = [128, 0], sizes = [16, 32], strides = [1, 1]} : vector<160x32xf32> to vector<16x32xf32>
    %61 = arith.truncf %60 : vector<16x32xf32> to vector<16x32xbf16>
    %c256 = arith.constant 256 : index
    %c0_31 = arith.constant 0 : index
    %62 = vector.load %arg4[%c256, %c0_31] : memref<448x128xbf16, #tpu.memory_space<vmem>>, vector<32x128xbf16>
    %cst_32 = arith.constant dense<0.000000e+00> : vector<16x128xf32>
    %63 = tpu.matmul %61, %62, %cst_32 {dimension_numbers = #tpu.dot_dimension_numbers<[1], [0], [0], [1], [0, 0, 1, 1], [], []>} : vector<16x32xbf16>, vector<32x128xbf16>, vector<16x128xf32> -> vector<16x128xf32>
    %64 = vector.extract_strided_slice %27 {offsets = [144, 0], sizes = [16, 32], strides = [1, 1]} : vector<160x32xf32> to vector<16x32xf32>
    %65 = arith.truncf %64 : vector<16x32xf32> to vector<16x32xbf16>
    %c288 = arith.constant 288 : index
    %c0_33 = arith.constant 0 : index
    %66 = vector.load %arg4[%c288, %c0_33] : memref<448x128xbf16, #tpu.memory_space<vmem>>, vector<32x128xbf16>
    %cst_34 = arith.constant dense<0.000000e+00> : vector<16x128xf32>
    %67 = tpu.matmul %65, %66, %cst_34 {dimension_numbers = #tpu.dot_dimension_numbers<[1], [0], [0], [1], [0, 0, 1, 1], [], []>} : vector<16x32xbf16>, vector<32x128xbf16>, vector<16x128xf32> -> vector<16x128xf32>
    %68 = arith.addf %31, %35 : vector<16x128xf32>
    %69 = arith.addf %39, %43 : vector<16x128xf32>
    %70 = arith.addf %47, %51 : vector<16x128xf32>
    %71 = arith.addf %55, %59 : vector<16x128xf32>
    %72 = arith.addf %63, %67 : vector<16x128xf32>
    %73 = arith.addf %68, %69 : vector<16x128xf32>
    %74 = arith.addf %70, %71 : vector<16x128xf32>
    %75 = arith.addf %73, %74 : vector<16x128xf32>
    %76 = arith.addf %75, %72 : vector<16x128xf32>
    %77 = vector.broadcast %4 : vector<1x128xf32> to vector<16x128xf32>
    %78 = arith.addf %76, %77 : vector<16x128xf32>
    %cst_35 = arith.constant 0.000000e+00 : f32
    %79 = vector.broadcast %cst_35 : f32 to vector<16x128xf32>
    %80 = arith.maximumf %78, %79 : vector<16x128xf32>
    %c320 = arith.constant 320 : index
    %c0_36 = arith.constant 0 : index
    %81 = vector.load %arg4[%c320, %c0_36] : memref<448x128xbf16, #tpu.memory_space<vmem>>, vector<128x128xbf16>
    %82 = arith.truncf %80 : vector<16x128xf32> to vector<16x128xbf16>
    %cst_37 = arith.constant dense<0.000000e+00> : vector<16x128xf32>
    %83 = tpu.matmul %82, %81, %cst_37 {dimension_numbers = #tpu.dot_dimension_numbers<[1], [0], [0], [1], [0, 0, 1, 1], [], []>} : vector<16x128xbf16>, vector<128x128xbf16>, vector<16x128xf32> -> vector<16x128xf32>
    %84 = vector.broadcast %5 : vector<1x128xf32> to vector<16x128xf32>
    %85 = arith.addf %83, %84 : vector<16x128xf32>
    %c0_38 = arith.constant 0 : index
    %c0_39 = arith.constant 0 : index
    %86 = vector.load %arg6[%c0_38, %c0_39] : memref<16x128xf32, #tpu.memory_space<vmem>>, vector<16x128xf32>
    tpu.vector_store %arg6[%c0_38, %c0_39], %85 {strides = array<i32>} : memref<16x128xf32, #tpu.memory_space<vmem>>, vector<16x128xf32>,
    return
  }
}

</mosaic_0001>

<llo_original>
// kernel: tpu_custom_call.1
$region0: #{tpu_custom_call.1}
  #allocation0 [shape = 'u32[]', space=smem, size = 0x4, offset = 0x4, fixed_abs, tag = 'smem constant byte address 0x4 - core index']
  #allocation1 [shape = 'u32[144,128]{1,0:T(1,128)}', space=vmem, size = 0x12000, scoped, tag = 'internal scratch']
  %s0 = inlined_call_operand.vmem [shape: f32[160,16], index: 0, kind: input, shape index: {}]
  %s1 = inlined_call_operand.vmem [shape: bf16[16,128], index: 1, kind: input, shape index: {}]
  %s2 = inlined_call_operand.vmem [shape: bf16[128,64], index: 2, kind: input, shape index: {}]
  %s3 = inlined_call_operand.vmem [shape: bf16[64,32], index: 3, kind: input, shape index: {}]
  %s4 = inlined_call_operand.vmem [shape: bf16[448,128], index: 4, kind: input, shape index: {}]
  %s5 = inlined_call_operand.vmem [shape: f32[8,128], index: 5, kind: input, shape index: {}]
  %s6 = inlined_call_operand.hbm [shape: f32[16,128], index: 6, kind: output, shape index: {}]
  %s7 = sld [smem:[#allocation0]]
  $region34: #{tpu_custom_call.1} parent=0
    _
  %s9 = ssub.s32 1, %s7
  %s10 = scalar_select 0, %s9, %s7
  $region1: #{tpu_custom_call.1} parent=0
    #allocation2 [shape = 'u8[8192]{0}', space=vmem, size = 0x2000, scoped, tag = 'output window, operand 0, single buffered']
    #allocation3 [shape = 's32[1]{0}', space=sflag, size = 0x4, scoped, tag = 'scoped memory for tpu_custom_call.1']
    %11 = vsyncpa [#allocation3], 0
    // Predicated region
    $region2: #{tpu_custom_call.1} parent=1 // pred_check
      _
    $region3: #{tpu_custom_call.1} parent=1 // pred_check_branch
      %13 = sbr.rel (0) target = $region5
    $region4: #{tpu_custom_call.1} parent=1 // pred_region
      _
    $region5: #{tpu_custom_call.1} parent=1 // pred_fallthru
      _
    // Predicated region
    $region6: #{tpu_custom_call.1} parent=1 // pred_check
      _
    $region7: #{tpu_custom_call.1} parent=1 // pred_check_branch
      %15 = sbr.rel (0) target = $region9
    $region8: #{tpu_custom_call.1} parent=1 // pred_region
      _
    $region9: #{tpu_custom_call.1} parent=1 // pred_fallthru
      _
    // Predicated region
    $region10: #{tpu_custom_call.1} parent=1 // pred_check
      _
    $region11: #{tpu_custom_call.1} parent=1 // pred_check_branch
      %17 = sbr.rel (0) target = $region13
    $region12: #{tpu_custom_call.1} parent=1 // pred_region
      _
    $region13: #{tpu_custom_call.1} parent=1 // pred_fallthru
      _
    // Predicated region
    $region14: #{tpu_custom_call.1} parent=1 // pred_check
      _
    $region15: #{tpu_custom_call.1} parent=1 // pred_check_branch
      %19 = sbr.rel (0) target = $region17
    $region16: #{tpu_custom_call.1} parent=1 // pred_region
      _
    $region17: #{tpu_custom_call.1} parent=1 // pred_fallthru
      _
    // Predicated region
    $region18: #{tpu_custom_call.1} parent=1 // pred_check
      _
    $region19: #{tpu_custom_call.1} parent=1 // pred_check_branch
      %21 = sbr.rel (0) target = $region21
    $region20: #{tpu_custom_call.1} parent=1 // pred_region
      _
    $region21: #{tpu_custom_call.1} parent=1 // pred_fallthru
      _
    // Predicated region
    $region22: #{tpu_custom_call.1} parent=1 // pred_check
      _
    $region23: #{tpu_custom_call.1} parent=1 // pred_check_branch
      %23 = sbr.rel (0) target = $region25
    $region24: #{tpu_custom_call.1} parent=1 // pred_region
      _
    $region25: #{tpu_custom_call.1} parent=1 // pred_fallthru
      _
    %v25 = vld [vmem:[%s5] sm:$0xff]
    %v26 = vld [vmem:[%s0] sm:$0xff]
    %v27 = vld [vmem:[%s0 + $0x8] sm:$0xff]
    %v28 = vld [vmem:[%s0 + $0x10] sm:$0xff]
    %v29 = vld [vmem:[%s0 + $0x18] sm:$0xff]
    %v30 = vld [vmem:[%s0 + $0x20] sm:$0xff]
    %v31 = vld [vmem:[%s0 + $0x28] sm:$0xff]
    %v32 = vld [vmem:[%s0 + $0x30] sm:$0xff]
    %v33 = vld [vmem:[%s0 + $0x38] sm:$0xff]
    %v34 = vld [vmem:[%s0 + $0x40] sm:$0xff]
    %v35 = vld [vmem:[%s0 + $0x48] sm:$0xff]
    %v36 = vld [vmem:[%s0 + $0x50] sm:$0xff]
    %v37 = vld [vmem:[%s0 + $0x58] sm:$0xff]
    %v38 = vld [vmem:[%s0 + $0x60] sm:$0xff]
    %v39 = vld [vmem:[%s0 + $0x68] sm:$0xff]
    %v40 = vld [vmem:[%s0 + $0x70] sm:$0xff]
    %v41 = vld [vmem:[%s0 + $0x78] sm:$0xff]
    %v42 = vld [vmem:[%s0 + $0x80] sm:$0xff]
    %v43 = vld [vmem:[%s0 + $0x88] sm:$0xff]
    %v44 = vld [vmem:[%s0 + $0x90] sm:$0xff]
    %v45 = vld [vmem:[%s0 + $0x98] sm:$0xff]
    %v46 = vpack.c.bf16 %v27, %v26
    %v47 = vpack.c.bf16 %v29, %v28
    %v48 = vpack.c.bf16 %v31, %v30
    %v49 = vpack.c.bf16 %v33, %v32
    %v50 = vpack.c.bf16 %v35, %v34
    %v51 = vpack.c.bf16 %v37, %v36
    %v52 = vpack.c.bf16 %v39, %v38
    %v53 = vpack.c.bf16 %v41, %v40
    %v54 = vpack.c.bf16 %v43, %v42
    %v55 = vpack.c.bf16 %v45, %v44
    %v56 = vld [vmem:[%s1] sm:$0xf]
    %v57 = vld [vmem:[%s1 + $0x4] sm:$0xf]
    %v58 = vlaneseq
    %v59 = vshrl.u32 %v58, 7
    %v60 = vsub.s32 0, %v59
    %v61 = vrot.slane %v25, %v60
    %v64 = vunpack.c.l.b16 %v56
    %v65 = vunpack.c.l.b16 %v57
    %v66 = vpack.c.b16 %v65, %v64
    %vm68 = vcmask 130048
    %v70 = vsel %vm68, %v46, 0
    %v73 = vsel %vm68, %v47, 0
    %v76 = vsel %vm68, %v48, 0
    %v79 = vsel %vm68, %v49, 0
    %v82 = vsel %vm68, %v50, 0
    %v85 = vsel %vm68, %v51, 0
    %v88 = vsel %vm68, %v52, 0
    %v91 = vsel %vm68, %v53, 0
    %v94 = vsel %vm68, %v54, 0
    %v97 = vsel %vm68, %v55, 0
    %99 = vmatprep.subr.bf16.mxu0 0
    %100 = vmatpush1.bf16.msra.mxu0 %v66
    %101 = vmatprep.subr.bf16.mxu0 0
    %102 = vmatpush1.bf16.msra.mxu0 0
    %103 = vmatprep.subr.bf16.mxu0 0
    %104 = vmatpush1.bf16.msra.mxu0 0
    %105 = vmatprep.subr.bf16.mxu0 0
    %106 = vmatpush1.bf16.msra.mxu0 0
    %107 = vmatprep.subr.bf16.mxu0 0
    %108 = vmatpush1.bf16.msra.mxu0 0
    %109 = vmatprep.subr.bf16.mxu0 0
    %110 = vmatpush1.bf16.msra.mxu0 0
    %111 = vmatprep.subr.bf16.mxu0 0
    %112 = vmatpush1.bf16.msra.mxu0 0
    %113 = vmatprep.subr.bf16.mxu0 0
    %114 = vmatpush1.bf16.msra.mxu0 0
    %115 = vmatprep.subr.bf16.mxu0 0
    %116 = vmatpush1.bf16.msra.mxu0 0
    %117 = vmatprep.subr.bf16.mxu0 0
    %118 = vmatpush1.bf16.msra.mxu0 0
    %119 = vmatprep.subr.bf16.mxu0 0
    %120 = vmatpush1.bf16.msra.mxu0 0
    %121 = vmatprep.subr.bf16.mxu0 0
    %122 = vmatpush1.bf16.msra.mxu0 0
    %123 = vmatprep.subr.bf16.mxu0 0
    %124 = vmatpush1.bf16.msra.mxu0 0
    %125 = vmatprep.subr.bf16.mxu0 0
    %126 = vmatpush1.bf16.msra.mxu0 0
    %127 = vmatprep.subr.bf16.mxu0 0
    %128 = vmatpush1.bf16.msra.mxu0 0
    %129 = vmatprep.subr.bf16.mxu0 0
    %130 = vmatpush1.bf16.msra.mxu0 0
    %131 = vmatprep.mubr.bf16.mxu0 0
    %132 = vmatmul.mubr.bf16.gmra.mrb[0].mxu0 %v70
    %v133 = vpop.f32.mrb[0].mxu0
    %v134 = vadd.f32 %v61, %v133
    %v135 = vpop.f32.mrb[0].mxu0
    %v136 = vpop.f32.mrb[0].mxu0
    %v137 = vadd.f32 %v61, %v136
    %v138 = vpop.f32.mrb[0].mxu0
    %139 = vmatprep.mubr.bf16.mxu0 0
    %140 = vmatmul.mubr.bf16.gmra.mrb[0].mxu0 %v73
    %v141 = vpop.f32.mrb[0].mxu0
    %v142 = vadd.f32 %v61, %v141
    %v143 = vpop.f32.mrb[0].mxu0
    %v144 = vpop.f32.mrb[0].mxu0
    %v145 = vadd.f32 %v61, %v144
    %v146 = vpop.f32.mrb[0].mxu0
    %147 = vmatprep.mubr.bf16.mxu0 0
    %148 = vmatmul.mubr.bf16.gmra.mrb[0].mxu0 %v76
    %v149 = vpop.f32.mrb[0].mxu0
    %v150 = vadd.f32 %v61, %v149
    %v151 = vpop.f32.mrb[0].mxu0
    %v152 = vpop.f32.mrb[0].mxu0
    %v153 = vadd.f32 %v61, %v152
    %v154 = vpop.f32.mrb[0].mxu0
    %155 = vmatprep.mubr.bf16.mxu0 0
    %156 = vmatmul.mubr.bf16.gmra.mrb[0].mxu0 %v79
    %v157 = vpop.f32.mrb[0].mxu0
    %v158 = vadd.f32 %v61, %v157
    %v159 = vpop.f32.mrb[0].mxu0
    %v160 = vpop.f32.mrb[0].mxu0
    %v161 = vadd.f32 %v61, %v160
    %v162 = vpop.f32.mrb[0].mxu0
    %163 = vmatprep.mubr.bf16.mxu0 0
    %164 = vmatmul.mubr.bf16.gmra.mrb[0].mxu0 %v82
    %v165 = vpop.f32.mrb[0].mxu0
    %v166 = vadd.f32 %v61, %v165
    %v167 = vpop.f32.mrb[0].mxu0
    %v168 = vpop.f32.mrb[0].mxu0
    %v169 = vadd.f32 %v61, %v168
    %v170 = vpop.f32.mrb[0].mxu0
    %171 = vmatprep.mubr.bf16.mxu0 0
    %172 = vmatmul.mubr.bf16.gmra.mrb[0].mxu0 %v85
    %v173 = vpop.f32.mrb[0].mxu0
    %v174 = vadd.f32 %v61, %v173
    %v175 = vpop.f32.mrb[0].mxu0
    %v176 = vpop.f32.mrb[0].mxu0
    %v177 = vadd.f32 %v61, %v176
    %v178 = vpop.f32.mrb[0].mxu0
    %179 = vmatprep.mubr.bf16.mxu0 0
    %180 = vmatmul.mubr.bf16.gmra.mrb[0].mxu0 %v88
    %v181 = vpop.f32.mrb[0].mxu0
    %v182 = vadd.f32 %v61, %v181
    %v183 = vpop.f32.mrb[0].mxu0
    %v184 = vpop.f32.mrb[0].mxu0
    %v185 = vadd.f32 %v61, %v184
    %v186 = vpop.f32.mrb[0].mxu0
    %187 = vmatprep.mubr.bf16.mxu0 0
    %188 = vmatmul.mubr.bf16.gmra.mrb[0].mxu0 %v91
    %v189 = vpop.f32.mrb[0].mxu0
    %v190 = vadd.f32 %v61, %v189
    %v191 = vpop.f32.mrb[0].mxu0
    %v192 = vpop.f32.mrb[0].mxu0
    %v193 = vadd.f32 %v61, %v192
    %v194 = vpop.f32.mrb[0].mxu0
    %195 = vmatprep.mubr.bf16.mxu0 0
    %196 = vmatmul.mubr.bf16.gmra.mrb[0].mxu0 %v94
    %v197 = vpop.f32.mrb[0].mxu0
    %v198 = vadd.f32 %v61, %v197
    %v199 = vpop.f32.mrb[0].mxu0
    %v200 = vpop.f32.mrb[0].mxu0
    %v201 = vadd.f32 %v61, %v200
    %v202 = vpop.f32.mrb[0].mxu0
    %203 = vmatprep.mubr.bf16.mxu0 0
    %204 = vmatmul.mubr.bf16.gmra.mrb[0].mxu0 %v97
    %v205 = vpop.f32.mrb[0].mxu0
    %v206 = vadd.f32 %v61, %v205
    %v207 = vpop.f32.mrb[0].mxu0
    %v208 = vpop.f32.mrb[0].mxu0
    %v209 = vadd.f32 %v61, %v208
    %v210 = vpop.f32.mrb[0].mxu0
    %211 = vdwg.mxu0
    %v212 = vmax.f32 %v134, 0.0
    %v213 = vmax.f32 %v137, 0.0
    %v214 = vmax.f32 %v142, 0.0
    %v215 = vmax.f32 %v145, 0.0
    %v216 = vmax.f32 %v150, 0.0
    %v217 = vmax.f32 %v153, 0.0
    %v218 = vmax.f32 %v158, 0.0
    %v219 = vmax.f32 %v161, 0.0
    %v220 = vmax.f32 %v166, 0.0
    %v221 = vmax.f32 %v169, 0.0
    %v222 = vmax.f32 %v174, 0.0
    %v223 = vmax.f32 %v177, 0.0
    %v224 = vmax.f32 %v182, 0.0
    %v225 = vmax.f32 %v185, 0.0
    %v226 = vmax.f32 %v190, 0.0
    %v227 = vmax.f32 %v193, 0.0
    %v228 = vmax.f32 %v198, 0.0
    %v229 = vmax.f32 %v201, 0.0
    %v230 = vmax.f32 %v206, 0.0
    %v231 = vmax.f32 %v209, 0.0
    %v232 = vpack.c.bf16 %v213, %v212
    %v233 = vpack.c.bf16 %v215, %v214
    %v234 = vpack.c.bf16 %v217, %v216
    %v235 = vpack.c.bf16 %v219, %v218
    %v236 = vpack.c.bf16 %v221, %v220
    %v237 = vpack.c.bf16 %v223, %v222
    %v238 = vpack.c.bf16 %v225, %v224
    %v239 = vpack.c.bf16 %v227, %v226
    %v240 = vpack.c.bf16 %v229, %v228
    %v241 = vpack.c.bf16 %v231, %v230
    %v242 = vld [vmem:[%s2] sm:$0xf]
    %v243 = vld [vmem:[%s2 + $0x4] sm:$0xf]
    %v244 = vld [vmem:[%s2 + $0x8] sm:$0xf]
    %v245 = vld [vmem:[%s2 + $0xc] sm:$0xf]
    %v246 = vld [vmem:[%s2 + $0x10] sm:$0xf]
    %v247 = vld [vmem:[%s2 + $0x14] sm:$0xf]
    %v248 = vld [vmem:[%s2 + $0x18] sm:$0xf]
    %v249 = vld [vmem:[%s2 + $0x1c] sm:$0xf]
    %v250 = vld [vmem:[%s2 + $0x20] sm:$0xf]
    %v251 = vld [vmem:[%s2 + $0x24] sm:$0xf]
    %v252 = vld [vmem:[%s2 + $0x28] sm:$0xf]
    %v253 = vld [vmem:[%s2 + $0x2c] sm:$0xf]
    %v254 = vld [vmem:[%s2 + $0x30] sm:$0xf]
    %v255 = vld [vmem:[%s2 + $0x34] sm:$0xf]
    %v256 = vld [vmem:[%s2 + $0x38] sm:$0xf]
    %v257 = vld [vmem:[%s2 + $0x3c] sm:$0xf]
    %v258 = vlaneseq
    %v259 = vshrl.u32 %v258, 7
    %v260 = vsub.s32 1, %v259
    %v261 = vrot.slane %v25, %v260
    %v278 = vunpack.c.l.b16 %v242
    %v279 = vunpack.c.l.b16 %v243
    %v280 = vunpack.c.l.b16 %v244
    %v281 = vunpack.c.l.b16 %v245
    %v282 = vunpack.c.l.b16 %v246
    %v283 = vunpack.c.l.b16 %v247
    %v284 = vunpack.c.l.b16 %v248
    %v285 = vunpack.c.l.b16 %v249
    %v286 = vunpack.c.l.b16 %v250
    %v287 = vunpack.c.l.b16 %v251
    %v288 = vunpack.c.l.b16 %v252
    %v289 = vunpack.c.l.b16 %v253
    %v290 = vunpack.c.l.b16 %v254
    %v291 = vunpack.c.l.b16 %v255
    %v292 = vunpack.c.l.b16 %v256
    %v293 = vunpack.c.l.b16 %v257
    %v294 = vpack.c.b16 %v279, %v278
    %v295 = vpack.c.b16 %v281, %v280
    %v296 = vpack.c.b16 %v283, %v282
    %v297 = vpack.c.b16 %v285, %v284
    %v298 = vpack.c.b16 %v287, %v286
    %v299 = vpack.c.b16 %v289, %v288
    %v300 = vpack.c.b16 %v291, %v290
    %v301 = vpack.c.b16 %v293, %v292
    %310 = vmatprep.subr.bf16.mxu0 0
    %311 = vmatpush1.bf16.msra.mxu0 %v294
    %312 = vmatprep.subr.bf16.mxu0 0
    %313 = vmatpush1.bf16.msra.mxu0 %v295
    %314 = vmatprep.subr.bf16.mxu0 0
    %315 = vmatpush1.bf16.msra.mxu0 %v296
    %316 = vmatprep.subr.bf16.mxu0 0
    %317 = vmatpush1.bf16.msra.mxu0 %v297
    %318 = vmatprep.subr.bf16.mxu0 0
    %319 = vmatpush1.bf16.msra.mxu0 %v298
    %320 = vmatprep.subr.bf16.mxu0 0
    %321 = vmatpush1.bf16.msra.mxu0 %v299
    %322 = vmatprep.subr.bf16.mxu0 0
    %323 = vmatpush1.bf16.msra.mxu0 %v300
    %324 = vmatprep.subr.bf16.mxu0 0
    %325 = vmatpush1.bf16.msra.mxu0 %v301
    %326 = vmatprep.subr.bf16.mxu0 0
    %327 = vmatpush1.bf16.msra.mxu0 0
    %328 = vmatprep.subr.bf16.mxu0 0
    %329 = vmatpush1.bf16.msra.mxu0 0
    %330 = vmatprep.subr.bf16.mxu0 0
    %331 = vmatpush1.bf16.msra.mxu0 0
    %332 = vmatprep.subr.bf16.mxu0 0
    %333 = vmatpush1.bf16.msra.mxu0 0
    %334 = vmatprep.subr.bf16.mxu0 0
    %335 = vmatpush1.bf16.msra.mxu0 0
    %336 = vmatprep.subr.bf16.mxu0 0
    %337 = vmatpush1.bf16.msra.mxu0 0
    %338 = vmatprep.subr.bf16.mxu0 0
    %339 = vmatpush1.bf16.msra.mxu0 0
    %340 = vmatprep.subr.bf16.mxu0 0
    %341 = vmatpush1.bf16.msra.mxu0 0
    %342 = vmatprep.mubr.bf16.mxu0 0
    %343 = vmatmul.mubr.bf16.gmra.mrb[0].mxu0 %v232
    %v344 = vpop.f32.mrb[0].mxu0
    %v345 = vadd.f32 %v261, %v344
    %v346 = vpop.f32.mrb[0].mxu0
    %v347 = vpop.f32.mrb[0].mxu0
    %v348 = vadd.f32 %v261, %v347
    %v349 = vpop.f32.mrb[0].mxu0
    %350 = vmatprep.mubr.bf16.mxu0 0
    %351 = vmatmul.mubr.bf16.gmra.mrb[0].mxu0 %v233
    %v352 = vpop.f32.mrb[0].mxu0
    %v353 = vadd.f32 %v261, %v352
    %v354 = vpop.f32.mrb[0].mxu0
    %v355 = vpop.f32.mrb[0].mxu0
    %v356 = vadd.f32 %v261, %v355
    %v357 = vpop.f32.mrb[0].mxu0
    %358 = vmatprep.mubr.bf16.mxu0 0
    %359 = vmatmul.mubr.bf16.gmra.mrb[0].mxu0 %v234
    %v360 = vpop.f32.mrb[0].mxu0
    %v361 = vadd.f32 %v261, %v360
    %v362 = vpop.f32.mrb[0].mxu0
    %v363 = vpop.f32.mrb[0].mxu0
    %v364 = vadd.f32 %v261, %v363
    %v365 = vpop.f32.mrb[0].mxu0
    %366 = vmatprep.mubr.bf16.mxu0 0
    %367 = vmatmul.mubr.bf16.gmra.mrb[0].mxu0 %v235
    %v368 = vpop.f32.mrb[0].mxu0
    %v369 = vadd.f32 %v261, %v368
    %v370 = vpop.f32.mrb[0].mxu0
    %v371 = vpop.f32.mrb[0].mxu0
    %v372 = vadd.f32 %v261, %v371
    %v373 = vpop.f32.mrb[0].mxu0
    %374 = vmatprep.mubr.bf16.mxu0 0
    %375 = vmatmul.mubr.bf16.gmra.mrb[0].mxu0 %v236
    %v376 = vpop.f32.mrb[0].mxu0
    %v377 = vadd.f32 %v261, %v376
    %v378 = vpop.f32.mrb[0].mxu0
    %v379 = vpop.f32.mrb[0].mxu0
    %v380 = vadd.f32 %v261, %v379
    %v381 = vpop.f32.mrb[0].mxu0
    %382 = vmatprep.mubr.bf16.mxu0 0
    %383 = vmatmul.mubr.bf16.gmra.mrb[0].mxu0 %v237
    %v384 = vpop.f32.mrb[0].mxu0
    %v385 = vadd.f32 %v261, %v384
    %v386 = vpop.f32.mrb[0].mxu0
    %v387 = vpop.f32.mrb[0].mxu0
    %v388 = vadd.f32 %v261, %v387
    %v389 = vpop.f32.mrb[0].mxu0
    %390 = vmatprep.mubr.bf16.mxu0 0
    %391 = vmatmul.mubr.bf16.gmra.mrb[0].mxu0 %v238
    %v392 = vpop.f32.mrb[0].mxu0
    %v393 = vadd.f32 %v261, %v392
    %v394 = vpop.f32.mrb[0].mxu0
    %v395 = vpop.f32.mrb[0].mxu0
    %v396 = vadd.f32 %v261, %v395
    %v397 = vpop.f32.mrb[0].mxu0
    %398 = vmatprep.mubr.bf16.mxu0 0
    %399 = vmatmul.mubr.bf16.gmra.mrb[0].mxu0 %v239
    %v400 = vpop.f32.mrb[0].mxu0
    %v401 = vadd.f32 %v261, %v400
    %v402 = vpop.f32.mrb[0].mxu0
    %v403 = vpop.f32.mrb[0].mxu0
    %v404 = vadd.f32 %v261, %v403
    %v405 = vpop.f32.mrb[0].mxu0
    %406 = vmatprep.mubr.bf16.mxu0 0
    %407 = vmatmul.mubr.bf16.gmra.mrb[0].mxu0 %v240
    %v408 = vpop.f32.mrb[0].mxu0
    %v409 = vadd.f32 %v261, %v408
    %v410 = vpop.f32.mrb[0].mxu0
    %v411 = vpop.f32.mrb[0].mxu0
    %v412 = vadd.f32 %v261, %v411
    %v413 = vpop.f32.mrb[0].mxu0
    %414 = vmatprep.mubr.bf16.mxu0 0
    %415 = vmatmul.mubr.bf16.gmra.mrb[0].mxu0 %v241
    %v416 = vpop.f32.mrb[0].mxu0
    %v417 = vadd.f32 %v261, %v416
    %v418 = vpop.f32.mrb[0].mxu0
    %v419 = vpop.f32.mrb[0].mxu0
    %v420 = vadd.f32 %v261, %v419
    %v421 = vpop.f32.mrb[0].mxu0
    %422 = vdwg.mxu0
    %v423 = vmax.f32 %v345, 0.0
    %v424 = vmax.f32 %v348, 0.0
    %v425 = vmax.f32 %v353, 0.0
    %v426 = vmax.f32 %v356, 0.0
    %v427 = vmax.f32 %v361, 0.0
    %v428 = vmax.f32 %v364, 0.0
    %v429 = vmax.f32 %v369, 0.0
    %v430 = vmax.f32 %v372, 0.0
    %v431 = vmax.f32 %v377, 0.0
    %v432 = vmax.f32 %v380, 0.0
    %v433 = vmax.f32 %v385, 0.0
    %v434 = vmax.f32 %v388, 0.0
    %v435 = vmax.f32 %v393, 0.0
    %v436 = vmax.f32 %v396, 0.0
    %v437 = vmax.f32 %v401, 0.0
    %v438 = vmax.f32 %v404, 0.0
    %v439 = vmax.f32 %v409, 0.0
    %v440 = vmax.f32 %v412, 0.0
    %v441 = vmax.f32 %v417, 0.0
    %v442 = vmax.f32 %v420, 0.0
    %v443 = vpack.c.bf16 %v424, %v423
    %v444 = vpack.c.bf16 %v426, %v425
    %v445 = vpack.c.bf16 %v428, %v427
    %v446 = vpack.c.bf16 %v430, %v429
    %v447 = vpack.c.bf16 %v432, %v431
    %v448 = vpack.c.bf16 %v434, %v433
    %v449 = vpack.c.bf16 %v436, %v435
    %v450 = vpack.c.bf16 %v438, %v437
    %v451 = vpack.c.bf16 %v440, %v439
    %v452 = vpack.c.bf16 %v442, %v441
    %v453 = vld [vmem:[%s3] sm:$0xf]
    %v454 = vld [vmem:[%s3 + $0x4] sm:$0xf]
    %v455 = vld [vmem:[%s3 + $0x8] sm:$0xf]
    %v456 = vld [vmem:[%s3 + $0xc] sm:$0xf]
    %v457 = vld [vmem:[%s3 + $0x10] sm:$0xf]
    %v458 = vld [vmem:[%s3 + $0x14] sm:$0xf]
    %v459 = vld [vmem:[%s3 + $0x18] sm:$0xf]
    %v460 = vld [vmem:[%s3 + $0x1c] sm:$0xf]
    %v461 = vlaneseq
    %v462 = vshrl.u32 %v461, 7
    %v463 = vsub.s32 2, %v462
    %v464 = vrot.slane %v25, %v463
    %v473 = vunpack.c.l.b16 %v453
    %v474 = vunpack.c.l.b16 %v454
    %v475 = vunpack.c.l.b16 %v455
    %v476 = vunpack.c.l.b16 %v456
    %v477 = vunpack.c.l.b16 %v457
    %v478 = vunpack.c.l.b16 %v458
    %v479 = vunpack.c.l.b16 %v459
    %v480 = vunpack.c.l.b16 %v460
    %v481 = vpack.c.b16 %v474, %v473
    %v482 = vpack.c.b16 %v476, %v475
    %v483 = vpack.c.b16 %v478, %v477
    %v484 = vpack.c.b16 %v480, %v479
    %vm489 = vcmask 523264
    %v491 = vsel %vm489, %v443, 0
    %v494 = vsel %vm489, %v444, 0
    %v497 = vsel %vm489, %v445, 0
    %v500 = vsel %vm489, %v446, 0
    %v503 = vsel %vm489, %v447, 0
    %v506 = vsel %vm489, %v448, 0
    %v509 = vsel %vm489, %v449, 0
    %v512 = vsel %vm489, %v450, 0
    %v515 = vsel %vm489, %v451, 0
    %v518 = vsel %vm489, %v452, 0
    %520 = vmatprep.subr.bf16.mxu0 0
    %521 = vmatpush1.bf16.msra.mxu0 %v481
    %522 = vmatprep.subr.bf16.mxu0 0
    %523 = vmatpush1.bf16.msra.mxu0 %v482
    %524 = vmatprep.subr.bf16.mxu0 0
    %525 = vmatpush1.bf16.msra.mxu0 %v483
    %526 = vmatprep.subr.bf16.mxu0 0
    %527 = vmatpush1.bf16.msra.mxu0 %v484
    %528 = vmatprep.subr.bf16.mxu0 0
    %529 = vmatpush1.bf16.msra.mxu0 0
    %530 = vmatprep.subr.bf16.mxu0 0
    %531 = vmatpush1.bf16.msra.mxu0 0
    %532 = vmatprep.subr.bf16.mxu0 0
    %533 = vmatpush1.bf16.msra.mxu0 0
    %534 = vmatprep.subr.bf16.mxu0 0
    %535 = vmatpush1.bf16.msra.mxu0 0
    %536 = vmatprep.subr.bf16.mxu0 0
    %537 = vmatpush1.bf16.msra.mxu0 0
    %538 = vmatprep.subr.bf16.mxu0 0
    %539 = vmatpush1.bf16.msra.mxu0 0
    %540 = vmatprep.subr.bf16.mxu0 0
    %541 = vmatpush1.bf16.msra.mxu0 0
    %542 = vmatprep.subr.bf16.mxu0 0
    %543 = vmatpush1.bf16.msra.mxu0 0
    %544 = vmatprep.subr.bf16.mxu0 0
    %545 = vmatpush1.bf16.msra.mxu0 0
    %546 = vmatprep.subr.bf16.mxu0 0
    %547 = vmatpush1.bf16.msra.mxu0 0
    %548 = vmatprep.subr.bf16.mxu0 0
    %549 = vmatpush1.bf16.msra.mxu0 0
    %550 = vmatprep.subr.bf16.mxu0 0
    %551 = vmatpush1.bf16.msra.mxu0 0
    %552 = vmatprep.mubr.bf16.mxu0 0
    %553 = vmatmul.mubr.bf16.gmra.mrb[0].mxu0 %v491
    %v554 = vpop.f32.mrb[0].mxu0
    %v555 = vadd.f32 %v464, %v554
    %v556 = vpop.f32.mrb[0].mxu0
    %v557 = vpop.f32.mrb[0].mxu0
    %v558 = vadd.f32 %v464, %v557
    %v559 = vpop.f32.mrb[0].mxu0
    %560 = vmatprep.mubr.bf16.mxu0 0
    %561 = vmatmul.mubr.bf16.gmra.mrb[0].mxu0 %v494
    %v562 = vpop.f32.mrb[0].mxu0
    %v563 = vadd.f32 %v464, %v562
    %v564 = vpop.f32.mrb[0].mxu0
    %v565 = vpop.f32.mrb[0].mxu0
    %v566 = vadd.f32 %v464, %v565
    %v567 = vpop.f32.mrb[0].mxu0
    %568 = vmatprep.mubr.bf16.mxu0 0
    %569 = vmatmul.mubr.bf16.gmra.mrb[0].mxu0 %v497
    %v570 = vpop.f32.mrb[0].mxu0
    %v571 = vadd.f32 %v464, %v570
    %v572 = vpop.f32.mrb[0].mxu0
    %v573 = vpop.f32.mrb[0].mxu0
    %v574 = vadd.f32 %v464, %v573
    %v575 = vpop.f32.mrb[0].mxu0
    %576 = vmatprep.mubr.bf16.mxu0 0
    %577 = vmatmul.mubr.bf16.gmra.mrb[0].mxu0 %v500
    %v578 = vpop.f32.mrb[0].mxu0
    %v579 = vadd.f32 %v464, %v578
    %v580 = vpop.f32.mrb[0].mxu0
    %v581 = vpop.f32.mrb[0].mxu0
    %v582 = vadd.f32 %v464, %v581
    %v583 = vpop.f32.mrb[0].mxu0
    %584 = vmatprep.mubr.bf16.mxu0 0
    %585 = vmatmul.mubr.bf16.gmra.mrb[0].mxu0 %v503
    %v586 = vpop.f32.mrb[0].mxu0
    %v587 = vadd.f32 %v464, %v586
    %v588 = vpop.f32.mrb[0].mxu0
    %v589 = vpop.f32.mrb[0].mxu0
    %v590 = vadd.f32 %v464, %v589
    %v591 = vpop.f32.mrb[0].mxu0
    %592 = vmatprep.mubr.bf16.mxu0 0
    %593 = vmatmul.mubr.bf16.gmra.mrb[0].mxu0 %v506
    %v594 = vpop.f32.mrb[0].mxu0
    %v595 = vadd.f32 %v464, %v594
    %v596 = vpop.f32.mrb[0].mxu0
    %v597 = vpop.f32.mrb[0].mxu0
    %v598 = vadd.f32 %v464, %v597
    %v599 = vpop.f32.mrb[0].mxu0
    %600 = vmatprep.mubr.bf16.mxu0 0
    %601 = vmatmul.mubr.bf16.gmra.mrb[0].mxu0 %v509
    %v602 = vpop.f32.mrb[0].mxu0
    %v603 = vadd.f32 %v464, %v602
    %v604 = vpop.f32.mrb[0].mxu0
    %v605 = vpop.f32.mrb[0].mxu0
    %v606 = vadd.f32 %v464, %v605
    %v607 = vpop.f32.mrb[0].mxu0
    %608 = vmatprep.mubr.bf16.mxu0 0
    %609 = vmatmul.mubr.bf16.gmra.mrb[0].mxu0 %v512
    %v610 = vpop.f32.mrb[0].mxu0
    %v611 = vadd.f32 %v464, %v610
    %v612 = vpop.f32.mrb[0].mxu0
    %v613 = vpop.f32.mrb[0].mxu0
    %v614 = vadd.f32 %v464, %v613
    %v615 = vpop.f32.mrb[0].mxu0
    %616 = vmatprep.mubr.bf16.mxu0 0
    %617 = vmatmul.mubr.bf16.gmra.mrb[0].mxu0 %v515
    %v618 = vpop.f32.mrb[0].mxu0
    %v619 = vadd.f32 %v464, %v618
    %v620 = vpop.f32.mrb[0].mxu0
    %v621 = vpop.f32.mrb[0].mxu0
    %v622 = vadd.f32 %v464, %v621
    %v623 = vpop.f32.mrb[0].mxu0
    %624 = vmatprep.mubr.bf16.mxu0 0
    %625 = vmatmul.mubr.bf16.gmra.mrb[0].mxu0 %v518
    %v626 = vpop.f32.mrb[0].mxu0
    %v627 = vadd.f32 %v464, %v626
    %v628 = vpop.f32.mrb[0].mxu0
    %v629 = vpop.f32.mrb[0].mxu0
    %v630 = vadd.f32 %v464, %v629
    %v631 = vpop.f32.mrb[0].mxu0
    %632 = vdwg.mxu0
    %v633 = vmax.f32 %v555, 0.0
    %v634 = vmax.f32 %v558, 0.0
    %v635 = vmax.f32 %v563, 0.0
    %v636 = vmax.f32 %v566, 0.0
    %v637 = vmax.f32 %v571, 0.0
    %v638 = vmax.f32 %v574, 0.0
    %v639 = vmax.f32 %v579, 0.0
    %v640 = vmax.f32 %v582, 0.0
    %v641 = vmax.f32 %v587, 0.0
    %v642 = vmax.f32 %v590, 0.0
    %v643 = vmax.f32 %v595, 0.0
    %v644 = vmax.f32 %v598, 0.0
    %v645 = vmax.f32 %v603, 0.0
    %v646 = vmax.f32 %v606, 0.0
    %v647 = vmax.f32 %v611, 0.0
    %v648 = vmax.f32 %v614, 0.0
    %v649 = vmax.f32 %v619, 0.0
    %v650 = vmax.f32 %v622, 0.0
    %v651 = vmax.f32 %v627, 0.0
    %v652 = vmax.f32 %v630, 0.0
    %v653 = vpack.c.bf16 %v634, %v633
    %v654 = vld [vmem:[%s4] sm:$0xf]
    %v655 = vld [vmem:[%s4 + $0x4] sm:$0xf]
    %v656 = vld [vmem:[%s4 + $0x8] sm:$0xf]
    %v657 = vld [vmem:[%s4 + $0xc] sm:$0xf]
    %v658 = vpack.c.bf16 %v636, %v635
    %v659 = vld [vmem:[%s4 + $0x10] sm:$0xf]
    %v660 = vld [vmem:[%s4 + $0x14] sm:$0xf]
    %v661 = vld [vmem:[%s4 + $0x18] sm:$0xf]
    %v662 = vld [vmem:[%s4 + $0x1c] sm:$0xf]
    %v667 = vunpack.c.l.b16 %v659
    %v668 = vunpack.c.l.b16 %v660
    %v669 = vunpack.c.l.b16 %v661
    %v670 = vunpack.c.l.b16 %v662
    %v671 = vpack.c.b16 %v668, %v667
    %v672 = vpack.c.b16 %v670, %v669
    %vm675 = vcmask 261120
    %v677 = vsel %vm675, %v658, 0
    %679 = vmatprep.subr.bf16.mxu0 0
    %680 = vmatpush1.bf16.msra.mxu0 %v671
    %681 = vmatprep.subr.bf16.mxu0 0
    %682 = vmatpush1.bf16.msra.mxu0 %v672
    %683 = vmatprep.subr.bf16.mxu0 0
    %684 = vmatpush1.bf16.msra.mxu0 0
    %685 = vmatprep.subr.bf16.mxu0 0
    %686 = vmatpush1.bf16.msra.mxu0 0
    %687 = vmatprep.subr.bf16.mxu0 0
    %688 = vmatpush1.bf16.msra.mxu0 0
    %689 = vmatprep.subr.bf16.mxu0 0
    %690 = vmatpush1.bf16.msra.mxu0 0
    %691 = vmatprep.subr.bf16.mxu0 0
    %692 = vmatpush1.bf16.msra.mxu0 0
    %693 = vmatprep.subr.bf16.mxu0 0
    %694 = vmatpush1.bf16.msra.mxu0 0
    %695 = vmatprep.subr.bf16.mxu0 0
    %696 = vmatpush1.bf16.msra.mxu0 0
    %697 = vmatprep.subr.bf16.mxu0 0
    %698 = vmatpush1.bf16.msra.mxu0 0
    %699 = vmatprep.subr.bf16.mxu0 0
    %700 = vmatpush1.bf16.msra.mxu0 0
    %701 = vmatprep.subr.bf16.mxu0 0
    %702 = vmatpush1.bf16.msra.mxu0 0
    %703 = vmatprep.subr.bf16.mxu0 0
    %704 = vmatpush1.bf16.msra.mxu0 0
    %705 = vmatprep.subr.bf16.mxu0 0
    %706 = vmatpush1.bf16.msra.mxu0 0
    %707 = vmatprep.subr.bf16.mxu0 0
    %708 = vmatpush1.bf16.msra.mxu0 0
    %709 = vmatprep.subr.bf16.mxu0 0
    %710 = vmatpush1.bf16.msra.mxu0 0
    %711 = vmatprep.mubr.bf16.mxu0 0
    %712 = vmatmul.mubr.bf16.gmra.mrb[0].mxu0 %v677
    %v713 = vpop.f32.mrb[0].mxu0
    %v714 = vadd.f32 0.0, %v713
    %v715 = vpop.f32.mrb[0].mxu0
    %v716 = vpop.f32.mrb[0].mxu0
    %v717 = vadd.f32 0.0, %v716
    %v718 = vpop.f32.mrb[0].mxu0
    %719 = vdwg.mxu0
    %v720 = vpack.c.bf16 %v638, %v637
    %v721 = vld [vmem:[%s4 + $0x20] sm:$0xf]
    %v722 = vld [vmem:[%s4 + $0x24] sm:$0xf]
    %v723 = vld [vmem:[%s4 + $0x28] sm:$0xf]
    %v724 = vld [vmem:[%s4 + $0x2c] sm:$0xf]
    %v725 = vpack.c.bf16 %v640, %v639
    %v726 = vld [vmem:[%s4 + $0x30] sm:$0xf]
    %v727 = vld [vmem:[%s4 + $0x34] sm:$0xf]
    %v728 = vld [vmem:[%s4 + $0x38] sm:$0xf]
    %v729 = vld [vmem:[%s4 + $0x3c] sm:$0xf]
    %v734 = vunpack.c.l.b16 %v726
    %v735 = vunpack.c.l.b16 %v727
    %v736 = vunpack.c.l.b16 %v728
    %v737 = vunpack.c.l.b16 %v729
    %v738 = vpack.c.b16 %v735, %v734
    %v739 = vpack.c.b16 %v737, %v736
    %v743 = vsel %vm675, %v725, 0
    %745 = vmatprep.subr.bf16.mxu0 0
    %746 = vmatpush1.bf16.msra.mxu0 %v738
    %747 = vmatprep.subr.bf16.mxu0 0
    %748 = vmatpush1.bf16.msra.mxu0 %v739
    %749 = vmatprep.subr.bf16.mxu0 0
    %750 = vmatpush1.bf16.msra.mxu0 0
    %751 = vmatprep.subr.bf16.mxu0 0
    %752 = vmatpush1.bf16.msra.mxu0 0
    %753 = vmatprep.subr.bf16.mxu0 0
    %754 = vmatpush1.bf16.msra.mxu0 0
    %755 = vmatprep.subr.bf16.mxu0 0
    %756 = vmatpush1.bf16.msra.mxu0 0
    %757 = vmatprep.subr.bf16.mxu0 0
    %758 = vmatpush1.bf16.msra.mxu0 0
    %759 = vmatprep.subr.bf16.mxu0 0
    %760 = vmatpush1.bf16.msra.mxu0 0
    %761 = vmatprep.subr.bf16.mxu0 0
    %762 = vmatpush1.bf16.msra.mxu0 0
    %763 = vmatprep.subr.bf16.mxu0 0
    %764 = vmatpush1.bf16.msra.mxu0 0
    %765 = vmatprep.subr.bf16.mxu0 0
    %766 = vmatpush1.bf16.msra.mxu0 0
    %767 = vmatprep.subr.bf16.mxu0 0
    %768 = vmatpush1.bf16.msra.mxu0 0
    %769 = vmatprep.subr.bf16.mxu0 0
    %770 = vmatpush1.bf16.msra.mxu0 0
    %771 = vmatprep.subr.bf16.mxu0 0
    %772 = vmatpush1.bf16.msra.mxu0 0
    %773 = vmatprep.subr.bf16.mxu0 0
    %774 = vmatpush1.bf16.msra.mxu0 0
    %775 = vmatprep.subr.bf16.mxu0 0
    %776 = vmatpush1.bf16.msra.mxu0 0
    %777 = vmatprep.mubr.bf16.mxu0 0
    %778 = vmatmul.mubr.bf16.gmra.mrb[0].mxu0 %v743
    %v779 = vpop.f32.mrb[0].mxu0
    %v780 = vadd.f32 0.0, %v779
    %v781 = vpop.f32.mrb[0].mxu0
    %v782 = vpop.f32.mrb[0].mxu0
    %v783 = vadd.f32 0.0, %v782
    %v784 = vpop.f32.mrb[0].mxu0
    %785 = vdwg.mxu0
    %v786 = vpack.c.bf16 %v642, %v641
    %v787 = vld [vmem:[%s4 + $0x40] sm:$0xf]
    %v788 = vld [vmem:[%s4 + $0x44] sm:$0xf]
    %v789 = vld [vmem:[%s4 + $0x48] sm:$0xf]
    %v790 = vld [vmem:[%s4 + $0x4c] sm:$0xf]
    %v791 = vpack.c.bf16 %v644, %v643
    %v792 = vld [vmem:[%s4 + $0x50] sm:$0xf]
    %v793 = vld [vmem:[%s4 + $0x54] sm:$0xf]
    %v794 = vld [vmem:[%s4 + $0x58] sm:$0xf]
    %v795 = vld [vmem:[%s4 + $0x5c] sm:$0xf]
    %v800 = vunpack.c.l.b16 %v792
    %v801 = vunpack.c.l.b16 %v793
    %v802 = vunpack.c.l.b16 %v794
    %v803 = vunpack.c.l.b16 %v795
    %v804 = vpack.c.b16 %v801, %v800
    %v805 = vpack.c.b16 %v803, %v802
    %v809 = vsel %vm675, %v791, 0
    %811 = vmatprep.subr.bf16.mxu0 0
    %812 = vmatpush1.bf16.msra.mxu0 %v804
    %813 = vmatprep.subr.bf16.mxu0 0
    %814 = vmatpush1.bf16.msra.mxu0 %v805
    %815 = vmatprep.subr.bf16.mxu0 0
    %816 = vmatpush1.bf16.msra.mxu0 0
    %817 = vmatprep.subr.bf16.mxu0 0
    %818 = vmatpush1.bf16.msra.mxu0 0
    %819 = vmatprep.subr.bf16.mxu0 0
    %820 = vmatpush1.bf16.msra.mxu0 0
    %821 = vmatprep.subr.bf16.mxu0 0
    %822 = vmatpush1.bf16.msra.mxu0 0
    %823 = vmatprep.subr.bf16.mxu0 0
    %824 = vmatpush1.bf16.msra.mxu0 0
    %825 = vmatprep.subr.bf16.mxu0 0
    %826 = vmatpush1.bf16.msra.mxu0 0
    %827 = vmatprep.subr.bf16.mxu0 0
    %828 = vmatpush1.bf16.msra.mxu0 0
    %829 = vmatprep.subr.bf16.mxu0 0
    %830 = vmatpush1.bf16.msra.mxu0 0
    %831 = vmatprep.subr.bf16.mxu0 0
    %832 = vmatpush1.bf16.msra.mxu0 0
    %833 = vmatprep.subr.bf16.mxu0 0
    %834 = vmatpush1.bf16.msra.mxu0 0
    %835 = vmatprep.subr.bf16.mxu0 0
    %836 = vmatpush1.bf16.msra.mxu0 0
    %837 = vmatprep.subr.bf16.mxu0 0
    %838 = vmatpush1.bf16.msra.mxu0 0
    %839 = vmatprep.subr.bf16.mxu0 0
    %840 = vmatpush1.bf16.msra.mxu0 0
    %841 = vmatprep.subr.bf16.mxu0 0
    %842 = vmatpush1.bf16.msra.mxu0 0
    %843 = vmatprep.mubr.bf16.mxu0 0
    %844 = vmatmul.mubr.bf16.gmra.mrb[0].mxu0 %v809
    %v845 = vpop.f32.mrb[0].mxu0
    %v846 = vadd.f32 0.0, %v845
    %v847 = vpop.f32.mrb[0].mxu0
    %v848 = vpop.f32.mrb[0].mxu0
    %v849 = vadd.f32 0.0, %v848
    %v850 = vpop.f32.mrb[0].mxu0
    %851 = vdwg.mxu0
    %v852 = vpack.c.bf16 %v646, %v645
    %v853 = vld [vmem:[%s4 + $0x60] sm:$0xf]
    %v854 = vld [vmem:[%s4 + $0x64] sm:$0xf]
    %v855 = vld [vmem:[%s4 + $0x68] sm:$0xf]
    %v856 = vld [vmem:[%s4 + $0x6c] sm:$0xf]
    %v857 = vpack.c.bf16 %v648, %v647
    %v858 = vld [vmem:[%s4 + $0x70] sm:$0xf]
    %v859 = vld [vmem:[%s4 + $0x74] sm:$0xf]
    %v860 = vld [vmem:[%s4 + $0x78] sm:$0xf]
    %v861 = vld [vmem:[%s4 + $0x7c] sm:$0xf]
    %v866 = vunpack.c.l.b16 %v858
    %v867 = vunpack.c.l.b16 %v859
    %v868 = vunpack.c.l.b16 %v860
    %v869 = vunpack.c.l.b16 %v861
    %v870 = vpack.c.b16 %v867, %v866
    %v871 = vpack.c.b16 %v869, %v868
    %v875 = vsel %vm675, %v857, 0
    %877 = vmatprep.subr.bf16.mxu0 0
    %878 = vmatpush1.bf16.msra.mxu0 %v870
    %879 = vmatprep.subr.bf16.mxu0 0
    %880 = vmatpush1.bf16.msra.mxu0 %v871
    %881 = vmatprep.subr.bf16.mxu0 0
    %882 = vmatpush1.bf16.msra.mxu0 0
    %883 = vmatprep.subr.bf16.mxu0 0
    %884 = vmatpush1.bf16.msra.mxu0 0
    %885 = vmatprep.subr.bf16.mxu0 0
    %886 = vmatpush1.bf16.msra.mxu0 0
    %887 = vmatprep.subr.bf16.mxu0 0
    %888 = vmatpush1.bf16.msra.mxu0 0
    %889 = vmatprep.subr.bf16.mxu0 0
    %890 = vmatpush1.bf16.msra.mxu0 0
    %891 = vmatprep.subr.bf16.mxu0 0
    %892 = vmatpush1.bf16.msra.mxu0 0
    %893 = vmatprep.subr.bf16.mxu0 0
    %894 = vmatpush1.bf16.msra.mxu0 0
    %895 = vmatprep.subr.bf16.mxu0 0
    %896 = vmatpush1.bf16.msra.mxu0 0
    %897 = vmatprep.subr.bf16.mxu0 0
    %898 = vmatpush1.bf16.msra.mxu0 0
    %899 = vmatprep.subr.bf16.mxu0 0
    %900 = vmatpush1.bf16.msra.mxu0 0
    %901 = vmatprep.subr.bf16.mxu0 0
    %902 = vmatpush1.bf16.msra.mxu0 0
    %903 = vmatprep.subr.bf16.mxu0 0
    %904 = vmatpush1.bf16.msra.mxu0 0
    %905 = vmatprep.subr.bf16.mxu0 0
    %906 = vmatpush1.bf16.msra.mxu0 0
    %907 = vmatprep.subr.bf16.mxu0 0
    %908 = vmatpush1.bf16.msra.mxu0 0
    %909 = vmatprep.mubr.bf16.mxu0 0
    %910 = vmatmul.mubr.bf16.gmra.mrb[0].mxu0 %v875
    %v911 = vpop.f32.mrb[0].mxu0
    %v912 = vadd.f32 0.0, %v911
    %v913 = vpop.f32.mrb[0].mxu0
    %v914 = vpop.f32.mrb[0].mxu0
    %v915 = vadd.f32 0.0, %v914
    %v916 = vpop.f32.mrb[0].mxu0
    %917 = vdwg.mxu0
    %v918 = vpack.c.bf16 %v650, %v649
    %v919 = vld [vmem:[%s4 + $0x80] sm:$0xf]
    %v920 = vld [vmem:[%s4 + $0x84] sm:$0xf]
    %v921 = vld [vmem:[%s4 + $0x88] sm:$0xf]
    %v922 = vld [vmem:[%s4 + $0x8c] sm:$0xf]
    %v923 = vpack.c.bf16 %v652, %v651
    %v924 = vld [vmem:[%s4 + $0x90] sm:$0xf]
    %v925 = vld [vmem:[%s4 + $0x94] sm:$0xf]
    %v926 = vld [vmem:[%s4 + $0x98] sm:$0xf]
    %v927 = vld [vmem:[%s4 + $0x9c] sm:$0xf]
    %v932 = vunpack.c.l.b16 %v924
    %v933 = vunpack.c.l.b16 %v925
    %v934 = vunpack.c.l.b16 %v926
    %v935 = vunpack.c.l.b16 %v927
    %v936 = vpack.c.b16 %v933, %v932
    %v937 = vpack.c.b16 %v935, %v934
    %v941 = vsel %vm675, %v923, 0
    %943 = vmatprep.subr.bf16.mxu0 0
    %944 = vmatpush1.bf16.msra.mxu0 %v936
    %945 = vmatprep.subr.bf16.mxu0 0
    %946 = vmatpush1.bf16.msra.mxu0 %v937
    %947 = vmatprep.subr.bf16.mxu0 0
    %948 = vmatpush1.bf16.msra.mxu0 0
    %949 = vmatprep.subr.bf16.mxu0 0
    %950 = vmatpush1.bf16.msra.mxu0 0
    %951 = vmatprep.subr.bf16.mxu0 0
    %952 = vmatpush1.bf16.msra.mxu0 0
    %953 = vmatprep.subr.bf16.mxu0 0
    %954 = vmatpush1.bf16.msra.mxu0 0
    %955 = vmatprep.subr.bf16.mxu0 0
    %956 = vmatpush1.bf16.msra.mxu0 0
    %957 = vmatprep.subr.bf16.mxu0 0
    %958 = vmatpush1.bf16.msra.mxu0 0
    %959 = vmatprep.subr.bf16.mxu0 0
    %960 = vmatpush1.bf16.msra.mxu0 0
    %961 = vmatprep.subr.bf16.mxu0 0
    %962 = vmatpush1.bf16.msra.mxu0 0
    %963 = vmatprep.subr.bf16.mxu0 0
    %964 = vmatpush1.bf16.msra.mxu0 0
    %965 = vmatprep.subr.bf16.mxu0 0
    %966 = vmatpush1.bf16.msra.mxu0 0
    %967 = vmatprep.subr.bf16.mxu0 0
    %968 = vmatpush1.bf16.msra.mxu0 0
    %969 = vmatprep.subr.bf16.mxu0 0
    %970 = vmatpush1.bf16.msra.mxu0 0
    %971 = vmatprep.subr.bf16.mxu0 0
    %972 = vmatpush1.bf16.msra.mxu0 0
    %973 = vmatprep.subr.bf16.mxu0 0
    %974 = vmatpush1.bf16.msra.mxu0 0
    %975 = vmatprep.mubr.bf16.mxu0 0
    %976 = vmatmul.mubr.bf16.gmra.mrb[0].mxu0 %v941
    %v977 = vpop.f32.mrb[0].mxu0
    %v978 = vadd.f32 0.0, %v977
    %v979 = vpop.f32.mrb[0].mxu0
    %v980 = vpop.f32.mrb[0].mxu0
    %v981 = vadd.f32 0.0, %v980
    %v982 = vpop.f32.mrb[0].mxu0
    %983 = vdwg.mxu0
    %v988 = vunpack.c.l.b16 %v654
    %v989 = vunpack.c.l.b16 %v655
    %v990 = vunpack.c.l.b16 %v656
    %v991 = vunpack.c.l.b16 %v657
    %v992 = vpack.c.b16 %v989, %v988
    %v993 = vpack.c.b16 %v991, %v990
    %v997 = vsel %vm675, %v653, 0
    %999 = vmatprep.subr.bf16.mxu0 0
    %1000 = vmatpush1.bf16.msra.mxu0 %v992
    %1001 = vmatprep.subr.bf16.mxu0 0
    %1002 = vmatpush1.bf16.msra.mxu0 %v993
    %1003 = vmatprep.subr.bf16.mxu0 0
    %1004 = vmatpush1.bf16.msra.mxu0 0
    %1005 = vmatprep.subr.bf16.mxu0 0
    %1006 = vmatpush1.bf16.msra.mxu0 0
    %1007 = vmatprep.subr.bf16.mxu0 0
    %1008 = vmatpush1.bf16.msra.mxu0 0
    %1009 = vmatprep.subr.bf16.mxu0 0
    %1010 = vmatpush1.bf16.msra.mxu0 0
    %1011 = vmatprep.subr.bf16.mxu0 0
    %1012 = vmatpush1.bf16.msra.mxu0 0
    %1013 = vmatprep.subr.bf16.mxu0 0
    %1014 = vmatpush1.bf16.msra.mxu0 0
    %1015 = vmatprep.subr.bf16.mxu0 0
    %1016 = vmatpush1.bf16.msra.mxu0 0
    %1017 = vmatprep.subr.bf16.mxu0 0
    %1018 = vmatpush1.bf16.msra.mxu0 0
    %1019 = vmatprep.subr.bf16.mxu0 0
    %1020 = vmatpush1.bf16.msra.mxu0 0
    %1021 = vmatprep.subr.bf16.mxu0 0
    %1022 = vmatpush1.bf16.msra.mxu0 0
    %1023 = vmatprep.subr.bf16.mxu0 0
    %1024 = vmatpush1.bf16.msra.mxu0 0
    %1025 = vmatprep.subr.bf16.mxu0 0
    %1026 = vmatpush1.bf16.msra.mxu0 0
    %1027 = vmatprep.subr.bf16.mxu0 0
    %1028 = vmatpush1.bf16.msra.mxu0 0
    %1029 = vmatprep.subr.bf16.mxu0 0
    %1030 = vmatpush1.bf16.msra.mxu0 0
    %1031 = vmatprep.mubr.bf16.mxu0 0
    %1032 = vmatmul.mubr.bf16.gmra.mrb[0].mxu0 %v997
    %v1033 = vpop.f32.mrb[0].mxu0
    %v1034 = vadd.f32 %v714, %v1033
    %v1035 = vpop.f32.mrb[0].mxu0
    %v1036 = vpop.f32.mrb[0].mxu0
    %v1037 = vadd.f32 %v717, %v1036
    %v1038 = vpop.f32.mrb[0].mxu0
    %1039 = vdwg.mxu0
    %v1044 = vunpack.c.l.b16 %v721
    %v1045 = vunpack.c.l.b16 %v722
    %v1046 = vunpack.c.l.b16 %v723
    %v1047 = vunpack.c.l.b16 %v724
    %v1048 = vpack.c.b16 %v1045, %v1044
    %v1049 = vpack.c.b16 %v1047, %v1046
    %v1053 = vsel %vm675, %v720, 0
    %1055 = vmatprep.subr.bf16.mxu0 0
    %1056 = vmatpush1.bf16.msra.mxu0 %v1048
    %1057 = vmatprep.subr.bf16.mxu0 0
    %1058 = vmatpush1.bf16.msra.mxu0 %v1049
    %1059 = vmatprep.subr.bf16.mxu0 0
    %1060 = vmatpush1.bf16.msra.mxu0 0
    %1061 = vmatprep.subr.bf16.mxu0 0
    %1062 = vmatpush1.bf16.msra.mxu0 0
    %1063 = vmatprep.subr.bf16.mxu0 0
    %1064 = vmatpush1.bf16.msra.mxu0 0
    %1065 = vmatprep.subr.bf16.mxu0 0
    %1066 = vmatpush1.bf16.msra.mxu0 0
    %1067 = vmatprep.subr.bf16.mxu0 0
    %1068 = vmatpush1.bf16.msra.mxu0 0
    %1069 = vmatprep.subr.bf16.mxu0 0
    %1070 = vmatpush1.bf16.msra.mxu0 0
    %1071 = vmatprep.subr.bf16.mxu0 0
    %1072 = vmatpush1.bf16.msra.mxu0 0
    %1073 = vmatprep.subr.bf16.mxu0 0
    %1074 = vmatpush1.bf16.msra.mxu0 0
    %1075 = vmatprep.subr.bf16.mxu0 0
    %1076 = vmatpush1.bf16.msra.mxu0 0
    %1077 = vmatprep.subr.bf16.mxu0 0
    %1078 = vmatpush1.bf16.msra.mxu0 0
    %1079 = vmatprep.subr.bf16.mxu0 0
    %1080 = vmatpush1.bf16.msra.mxu0 0
    %1081 = vmatprep.subr.bf16.mxu0 0
    %1082 = vmatpush1.bf16.msra.mxu0 0
    %1083 = vmatprep.subr.bf16.mxu0 0
    %1084 = vmatpush1.bf16.msra.mxu0 0
    %1085 = vmatprep.subr.bf16.mxu0 0
    %1086 = vmatpush1.bf16.msra.mxu0 0
    %1087 = vmatprep.mubr.bf16.mxu0 0
    %1088 = vmatmul.mubr.bf16.gmra.mrb[0].mxu0 %v1053
    %v1089 = vpop.f32.mrb[0].mxu0
    %v1090 = vadd.f32 %v780, %v1089
    %v1091 = vpop.f32.mrb[0].mxu0
    %v1092 = vpop.f32.mrb[0].mxu0
    %v1093 = vadd.f32 %v783, %v1092
    %v1094 = vpop.f32.mrb[0].mxu0
    %1095 = vdwg.mxu0
    %v1100 = vunpack.c.l.b16 %v787
    %v1101 = vunpack.c.l.b16 %v788
    %v1102 = vunpack.c.l.b16 %v789
    %v1103 = vunpack.c.l.b16 %v790
    %v1104 = vpack.c.b16 %v1101, %v1100
    %v1105 = vpack.c.b16 %v1103, %v1102
    %v1109 = vsel %vm675, %v786, 0
    %1111 = vmatprep.subr.bf16.mxu0 0
    %1112 = vmatpush1.bf16.msra.mxu0 %v1104
    %1113 = vmatprep.subr.bf16.mxu0 0
    %1114 = vmatpush1.bf16.msra.mxu0 %v1105
    %1115 = vmatprep.subr.bf16.mxu0 0
    %1116 = vmatpush1.bf16.msra.mxu0 0
    %1117 = vmatprep.subr.bf16.mxu0 0
    %1118 = vmatpush1.bf16.msra.mxu0 0
    %1119 = vmatprep.subr.bf16.mxu0 0
    %1120 = vmatpush1.bf16.msra.mxu0 0
    %1121 = vmatprep.subr.bf16.mxu0 0
    %1122 = vmatpush1.bf16.msra.mxu0 0
    %1123 = vmatprep.subr.bf16.mxu0 0
    %1124 = vmatpush1.bf16.msra.mxu0 0
    %1125 = vmatprep.subr.bf16.mxu0 0
    %1126 = vmatpush1.bf16.msra.mxu0 0
    %1127 = vmatprep.subr.bf16.mxu0 0
    %1128 = vmatpush1.bf16.msra.mxu0 0
    %1129 = vmatprep.subr.bf16.mxu0 0
    %1130 = vmatpush1.bf16.msra.mxu0 0
    %1131 = vmatprep.subr.bf16.mxu0 0
    %1132 = vmatpush1.bf16.msra.mxu0 0
    %1133 = vmatprep.subr.bf16.mxu0 0
    %1134 = vmatpush1.bf16.msra.mxu0 0
    %1135 = vmatprep.subr.bf16.mxu0 0
    %1136 = vmatpush1.bf16.msra.mxu0 0
    %1137 = vmatprep.subr.bf16.mxu0 0
    %1138 = vmatpush1.bf16.msra.mxu0 0
    %1139 = vmatprep.subr.bf16.mxu0 0
    %1140 = vmatpush1.bf16.msra.mxu0 0
    %1141 = vmatprep.subr.bf16.mxu0 0
    %1142 = vmatpush1.bf16.msra.mxu0 0
    %1143 = vmatprep.mubr.bf16.mxu0 0
    %1144 = vmatmul.mubr.bf16.gmra.mrb[0].mxu0 %v1109
    %v1145 = vpop.f32.mrb[0].mxu0
    %v1146 = vadd.f32 %v846, %v1145
    %v1147 = vpop.f32.mrb[0].mxu0
    %v1148 = vpop.f32.mrb[0].mxu0
    %v1149 = vadd.f32 %v849, %v1148
    %v1150 = vpop.f32.mrb[0].mxu0
    %1151 = vdwg.mxu0
    %v1156 = vunpack.c.l.b16 %v853
    %v1157 = vunpack.c.l.b16 %v854
    %v1158 = vunpack.c.l.b16 %v855
    %v1159 = vunpack.c.l.b16 %v856
    %v1160 = vpack.c.b16 %v1157, %v1156
    %v1161 = vpack.c.b16 %v1159, %v1158
    %v1165 = vsel %vm675, %v852, 0
    %1167 = vmatprep.subr.bf16.mxu0 0
    %1168 = vmatpush1.bf16.msra.mxu0 %v1160
    %1169 = vmatprep.subr.bf16.mxu0 0
    %1170 = vmatpush1.bf16.msra.mxu0 %v1161
    %1171 = vmatprep.subr.bf16.mxu0 0
    %1172 = vmatpush1.bf16.msra.mxu0 0
    %1173 = vmatprep.subr.bf16.mxu0 0
    %1174 = vmatpush1.bf16.msra.mxu0 0
    %1175 = vmatprep.subr.bf16.mxu0 0
    %1176 = vmatpush1.bf16.msra.mxu0 0
    %1177 = vmatprep.subr.bf16.mxu0 0
    %1178 = vmatpush1.bf16.msra.mxu0 0
    %1179 = vmatprep.subr.bf16.mxu0 0
    %1180 = vmatpush1.bf16.msra.mxu0 0
    %1181 = vmatprep.subr.bf16.mxu0 0
    %1182 = vmatpush1.bf16.msra.mxu0 0
    %1183 = vmatprep.subr.bf16.mxu0 0
    %1184 = vmatpush1.bf16.msra.mxu0 0
    %1185 = vmatprep.subr.bf16.mxu0 0
    %1186 = vmatpush1.bf16.msra.mxu0 0
    %1187 = vmatprep.subr.bf16.mxu0 0
    %1188 = vmatpush1.bf16.msra.mxu0 0
    %1189 = vmatprep.subr.bf16.mxu0 0
    %1190 = vmatpush1.bf16.msra.mxu0 0
    %1191 = vmatprep.subr.bf16.mxu0 0
    %1192 = vmatpush1.bf16.msra.mxu0 0
    %1193 = vmatprep.subr.bf16.mxu0 0
    %1194 = vmatpush1.bf16.msra.mxu0 0
    %1195 = vmatprep.subr.bf16.mxu0 0
    %1196 = vmatpush1.bf16.msra.mxu0 0
    %1197 = vmatprep.subr.bf16.mxu0 0
    %1198 = vmatpush1.bf16.msra.mxu0 0
    %1199 = vmatprep.mubr.bf16.mxu0 0
    %1200 = vmatmul.mubr.bf16.gmra.mrb[0].mxu0 %v1165
    %v1201 = vpop.f32.mrb[0].mxu0
    %v1202 = vadd.f32 %v912, %v1201
    %v1203 = vpop.f32.mrb[0].mxu0
    %v1204 = vpop.f32.mrb[0].mxu0
    %v1205 = vadd.f32 %v915, %v1204
    %v1206 = vpop.f32.mrb[0].mxu0
    %1207 = vdwg.mxu0
    %v1212 = vunpack.c.l.b16 %v919
    %v1213 = vunpack.c.l.b16 %v920
    %v1214 = vunpack.c.l.b16 %v921
    %v1215 = vunpack.c.l.b16 %v922
    %v1216 = vpack.c.b16 %v1213, %v1212
    %v1217 = vpack.c.b16 %v1215, %v1214
    %v1221 = vsel %vm675, %v918, 0
    %1223 = vmatprep.subr.bf16.mxu0 0
    %1224 = vmatpush1.bf16.msra.mxu0 %v1216
    %1225 = vmatprep.subr.bf16.mxu0 0
    %1226 = vmatpush1.bf16.msra.mxu0 %v1217
    %1227 = vmatprep.subr.bf16.mxu0 0
    %1228 = vmatpush1.bf16.msra.mxu0 0
    %1229 = vmatprep.subr.bf16.mxu0 0
    %1230 = vmatpush1.bf16.msra.mxu0 0
    %1231 = vmatprep.subr.bf16.mxu0 0
    %1232 = vmatpush1.bf16.msra.mxu0 0
    %1233 = vmatprep.subr.bf16.mxu0 0
    %1234 = vmatpush1.bf16.msra.mxu0 0
    %1235 = vmatprep.subr.bf16.mxu0 0
    %1236 = vmatpush1.bf16.msra.mxu0 0
    %1237 = vmatprep.subr.bf16.mxu0 0
    %1238 = vmatpush1.bf16.msra.mxu0 0
    %1239 = vmatprep.subr.bf16.mxu0 0
    %1240 = vmatpush1.bf16.msra.mxu0 0
    %1241 = vmatprep.subr.bf16.mxu0 0
    %1242 = vmatpush1.bf16.msra.mxu0 0
    %1243 = vmatprep.subr.bf16.mxu0 0
    %1244 = vmatpush1.bf16.msra.mxu0 0
    %1245 = vmatprep.subr.bf16.mxu0 0
    %1246 = vmatpush1.bf16.msra.mxu0 0
    %1247 = vmatprep.subr.bf16.mxu0 0
    %1248 = vmatpush1.bf16.msra.mxu0 0
    %1249 = vmatprep.subr.bf16.mxu0 0
    %1250 = vmatpush1.bf16.msra.mxu0 0
    %1251 = vmatprep.subr.bf16.mxu0 0
    %1252 = vmatpush1.bf16.msra.mxu0 0
    %1253 = vmatprep.subr.bf16.mxu0 0
    %1254 = vmatpush1.bf16.msra.mxu0 0
    %1255 = vmatprep.mubr.bf16.mxu0 0
    %1256 = vmatmul.mubr.bf16.gmra.mrb[0].mxu0 %v1221
    %v1257 = vpop.f32.mrb[0].mxu0
    %v1258 = vadd.f32 %v978, %v1257
    %v1259 = vpop.f32.mrb[0].mxu0
    %v1260 = vpop.f32.mrb[0].mxu0
    %v1261 = vadd.f32 %v981, %v1260
    %v1262 = vpop.f32.mrb[0].mxu0
    %1263 = vdwg.mxu0
    %v1264 = vadd.f32 %v1034, %v1090
    %v1265 = vadd.f32 %v1037, %v1093
    %v1266 = vadd.f32 %v1146, %v1202
    %v1267 = vadd.f32 %v1149, %v1205
    %v1268 = vadd.f32 %v1264, %v1266
    %v1269 = vadd.f32 %v1265, %v1267
    %v1270 = vadd.f32 %v1268, %v1258
    %v1271 = vadd.f32 %v1269, %v1261
    %v1272 = vlaneseq
    %v1273 = vshrl.u32 %v1272, 7
    %v1274 = vsub.s32 3, %v1273
    %v1275 = vrot.slane %v25, %v1274
    %v1276 = vadd.f32 %v1270, %v1275
    %v1277 = vadd.f32 %v1271, %v1275
    %v1278 = vmax.f32 %v1276, 0.0
    %v1279 = vmax.f32 %v1277, 0.0
    %v1280 = vld [vmem:[%s4 + $0xa0] sm:$0xf]
    %v1281 = vld [vmem:[%s4 + $0xa4] sm:$0xf]
    %v1282 = vld [vmem:[%s4 + $0xa8] sm:$0xf]
    %v1283 = vld [vmem:[%s4 + $0xac] sm:$0xf]
    %v1284 = vld [vmem:[%s4 + $0xb0] sm:$0xf]
    %v1285 = vld [vmem:[%s4 + $0xb4] sm:$0xf]
    %v1286 = vld [vmem:[%s4 + $0xb8] sm:$0xf]
    %v1287 = vld [vmem:[%s4 + $0xbc] sm:$0xf]
    %v1288 = vld [vmem:[%s4 + $0xc0] sm:$0xf]
    %v1289 = vld [vmem:[%s4 + $0xc4] sm:$0xf]
    %v1290 = vld [vmem:[%s4 + $0xc8] sm:$0xf]
    %v1291 = vld [vmem:[%s4 + $0xcc] sm:$0xf]
    %v1292 = vld [vmem:[%s4 + $0xd0] sm:$0xf]
    %v1293 = vld [vmem:[%s4 + $0xd4] sm:$0xf]
    %v1294 = vld [vmem:[%s4 + $0xd8] sm:$0xf]
    %v1295 = vld [vmem:[%s4 + $0xdc] sm:$0xf]
    %v1296 = vpack.c.bf16 %v1279, %v1278
    %v1297 = vlaneseq
    %v1298 = vshrl.u32 %v1297, 7
    %v1299 = vsub.s32 4, %v1298
    %v1300 = vrot.slane %v25, %v1299
    %v1317 = vunpack.c.l.b16 %v1280
    %v1318 = vunpack.c.l.b16 %v1281
    %v1319 = vunpack.c.l.b16 %v1282
    %v1320 = vunpack.c.l.b16 %v1283
    %v1321 = vunpack.c.l.b16 %v1284
    %v1322 = vunpack.c.l.b16 %v1285
    %v1323 = vunpack.c.l.b16 %v1286
    %v1324 = vunpack.c.l.b16 %v1287
    %v1325 = vunpack.c.l.b16 %v1288
    %v1326 = vunpack.c.l.b16 %v1289
    %v1327 = vunpack.c.l.b16 %v1290
    %v1328 = vunpack.c.l.b16 %v1291
    %v1329 = vunpack.c.l.b16 %v1292
    %v1330 = vunpack.c.l.b16 %v1293
    %v1331 = vunpack.c.l.b16 %v1294
    %v1332 = vunpack.c.l.b16 %v1295
    %v1333 = vpack.c.b16 %v1318, %v1317
    %v1334 = vpack.c.b16 %v1320, %v1319
    %v1335 = vpack.c.b16 %v1322, %v1321
    %v1336 = vpack.c.b16 %v1324, %v1323
    %v1337 = vpack.c.b16 %v1326, %v1325
    %v1338 = vpack.c.b16 %v1328, %v1327
    %v1339 = vpack.c.b16 %v1330, %v1329
    %v1340 = vpack.c.b16 %v1332, %v1331
    %1349 = vmatprep.subr.bf16.mxu0 0
    %1350 = vmatpush1.bf16.msra.mxu0 %v1333
    %1351 = vmatprep.subr.bf16.mxu0 0
    %1352 = vmatpush1.bf16.msra.mxu0 %v1334
    %1353 = vmatprep.subr.bf16.mxu0 0
    %1354 = vmatpush1.bf16.msra.mxu0 %v1335
    %1355 = vmatprep.subr.bf16.mxu0 0
    %1356 = vmatpush1.bf16.msra.mxu0 %v1336
    %1357 = vmatprep.subr.bf16.mxu0 0
    %1358 = vmatpush1.bf16.msra.mxu0 %v1337
    %1359 = vmatprep.subr.bf16.mxu0 0
    %1360 = vmatpush1.bf16.msra.mxu0 %v1338
    %1361 = vmatprep.subr.bf16.mxu0 0
    %1362 = vmatpush1.bf16.msra.mxu0 %v1339
    %1363 = vmatprep.subr.bf16.mxu0 0
    %1364 = vmatpush1.bf16.msra.mxu0 %v1340
    %1365 = vmatprep.subr.bf16.mxu0 0
    %1366 = vmatpush1.bf16.msra.mxu0 0
    %1367 = vmatprep.subr.bf16.mxu0 0
    %1368 = vmatpush1.bf16.msra.mxu0 0
    %1369 = vmatprep.subr.bf16.mxu0 0
    %1370 = vmatpush1.bf16.msra.mxu0 0
    %1371 = vmatprep.subr.bf16.mxu0 0
    %1372 = vmatpush1.bf16.msra.mxu0 0
    %1373 = vmatprep.subr.bf16.mxu0 0
    %1374 = vmatpush1.bf16.msra.mxu0 0
    %1375 = vmatprep.subr.bf16.mxu0 0
    %1376 = vmatpush1.bf16.msra.mxu0 0
    %1377 = vmatprep.subr.bf16.mxu0 0
    %1378 = vmatpush1.bf16.msra.mxu0 0
    %1379 = vmatprep.subr.bf16.mxu0 0
    %1380 = vmatpush1.bf16.msra.mxu0 0
    %1381 = vmatprep.mubr.bf16.mxu0 0
    %1382 = vmatmul.mubr.bf16.gmra.mrb[0].mxu0 %v1296
    %v1383 = vpop.f32.mrb[0].mxu0
    %v1384 = vadd.f32 %v1300, %v1383
    %v1385 = vpop.f32.mrb[0].mxu0
    %v1386 = vpop.f32.mrb[0].mxu0
    %v1387 = vadd.f32 %v1300, %v1386
    %v1388 = vpop.f32.mrb[0].mxu0
    %1389 = vdwg.mxu0
    %1390 = vst [vmem:[#allocation2] sm:$0xff] %v1384
    %1391 = vst [vmem:[#allocation2 + $0x8] sm:$0xff] %v1387
    // Predicated region
    $region26: #{tpu_custom_call.1} parent=1 // pred_check
      _
    $region27: #{tpu_custom_call.1} parent=1 // pred_check_branch
      %1393 = sbr.rel (0) target = $region29
    $region28: #{tpu_custom_call.1} parent=1 // pred_region
      %s1395 = ssub.s32 256, 256
      %1396 = vsyncadd [#allocation3], %s1395
      %s1397 = sshll.u32 [#allocation2], 4
      %s1398 = int_to_ptr.vmem [resolvable:$true] %s1397
      %1403 = dma.vmem_to_hbm [thread:$0]  %s1398, 256, %s6, [#allocation3], 128, 128, 8
    $region29: #{tpu_custom_call.1} parent=1 // pred_fallthru
      _
    // Predicated region
    $region30: #{tpu_custom_call.1} parent=1 // pred_check
      _
    $region31: #{tpu_custom_call.1} parent=1 // pred_check_branch
      %1405 = sbr.rel (0) target = $region33
    $region32: #{tpu_custom_call.1} parent=1 // pred_region
      %1406 = dma.done [#allocation3], 256
    $region33: #{tpu_custom_call.1} parent=1 // pred_fallthru
      _
    %1407 = vsyncpa [#allocation3], 1

</llo_original>
